<compile_context>
chip_gen: v6e
topology: v6e:2x2x1
jax: 0.10.0
libtpu: 0.0.40
codegen_flags: <defaults>
</compile_context>

<pallas_src>
import functools
import math

import jax
import jax.numpy as jnp
from jax import lax
from jax.experimental import pallas as pl
from jax.experimental.pallas import tpu as pltpu


MATMUL_DTYPE = jnp.bfloat16   # MXU operand dtype (full rate on v5e/v6e/v7x)
ACT_DTYPE = jnp.bfloat16      # inter-kernel activation dtype (halves HBM traffic)


def _vmem_limit_bytes():
    """Generation-aware scoped-VMEM budget: ~48 MiB on v7x (64 MiB physical), ~96 MiB on
    v5e/v6e (128 MiB physical), capped at 100 MiB."""
    try:
        cap = int(pltpu.get_tpu_info().vmem_capacity_bytes)
    except Exception:
        cap = 64 * 1024 * 1024  # conservative fallback = v7x physical VMEM
    return min((cap * 3) // 4, 100 * 1024 * 1024)


_VMEM_LIMIT = _vmem_limit_bytes()


def _row_tile(n, target=512):
    """Row tile for token-dim tiling (mem-bound kernels hit ~85% of HBM roofline at 512)."""
    return n if n <= target else target


# --------------------------- kernel 1: fused QKV projection ---------------------------

def _qkv_proj_kernel(q_ref, k_ref, v_ref, w_ref, b_ref, qo_ref, ko_ref, vo_ref):
    # q/k/v: (TM, E) f32 ; w: (3, E, E) bf16 resident ; b: (3, 1, E) f32 resident.
    # Outputs are bf16 (consumers immediately feed the MXU).
    for i, (x_ref, o_ref) in enumerate(((q_ref, qo_ref), (k_ref, ko_ref), (v_ref, vo_ref))):
        y = jnp.dot(x_ref[...].astype(MATMUL_DTYPE), w_ref[i],
                    preferred_element_type=jnp.float32)
        y = y + b_ref[i]
        o_ref[...] = y.astype(o_ref.dtype)


def qkv_projection(q2d, k2d, v2d, w_stack, b_stack):
    """q2d/k2d/v2d: (N, E) f32. w_stack: (3, E, E) bf16 (in, out). b_stack: (3, 1, E) f32.
    Returns three (N, E) bf16 arrays."""
    N, E = q2d.shape
    tm = _row_tile(N)
    row_spec = pl.BlockSpec((tm, E), lambda i: (i, 0))
    return pl.pallas_call(
        _qkv_proj_kernel,
        out_shape=tuple(jax.ShapeDtypeStruct((N, E), ACT_DTYPE) for _ in range(3)),
        grid=(pl.cdiv(N, tm),),
        in_specs=[
            row_spec, row_spec, row_spec,
            pl.BlockSpec((3, E, E), lambda i: (0, 0, 0)),   # weights resident across row tiles
            pl.BlockSpec((3, 1, E), lambda i: (0, 0, 0)),
        ],
        out_specs=tuple(pl.BlockSpec((tm, E), lambda i: (i, 0)) for _ in range(3)),
        compiler_params=pltpu.CompilerParams(
            dimension_semantics=("parallel",), vmem_limit_bytes=_VMEM_LIMIT),
    )(q2d, k2d, v2d, w_stack, b_stack)


# ---------------------- kernel 2: fused attention + out-projection ----------------------

def _attn_outproj_kernel(q_ref, k_ref, v_ref, wo_ref, bo_ref, o_ref, concat_ref,
                         *, num_heads, head_dim):
    # q_ref: (1, Sq, E) bf16, already scaled by 1/sqrt(D); k/v_ref: (1, Sk, E) bf16.
    # wo_ref: (E, E) bf16 (concat-in, out); bo_ref: (1, E) f32; o_ref: (1, Sq, E) bf16.
    # concat_ref: (Sq, E) bf16 VMEM scratch holding the head-concatenated attention output.
    for h in range(num_heads):                                   # static, small
        lo = h * head_dim
        hi = lo + head_dim
        q_h = q_ref[0, :, lo:hi]                                 # (Sq, D) bf16 (lane slice)
        k_h = k_ref[0, :, lo:hi]                                 # (Sk, D)
        v_h = v_ref[0, :, lo:hi]                                 # (Sk, D)
        # scores: contract on the shared last dim -- never materialize k.T
        s = lax.dot_general(q_h, k_h, (((1,), (1,)), ((), ())),
                            preferred_element_type=jnp.float32)  # (Sq, Sk) f32
        m = jnp.max(s, axis=-1, keepdims=True)
        p = jnp.exp(s - m)                                       # (Sq, Sk) f32
        l = jnp.sum(p, axis=-1, keepdims=True)                   # (Sq, 1) f32
        o_h = jnp.dot(p.astype(MATMUL_DTYPE), v_h,
                      preferred_element_type=jnp.float32)        # (Sq, D) f32
        # normalize on the (Sq, D) tile -- Sk/D x fewer VPU ops than normalizing p
        o_h = o_h * pl.reciprocal(l, approx=True)
        concat_ref[:, lo:hi] = o_h.astype(concat_ref.dtype)
    # single K=E out-projection matmul against the un-split weight (full MXU depth)
    out = jnp.dot(concat_ref[...], wo_ref[...],
                  preferred_element_type=jnp.float32) + bo_ref[...]
    o_ref[0] = out.astype(o_ref.dtype)


def attention_with_outproj(qp, kp, vp, wo, bo, num_heads):
    """qp/kp/vp: (B, S, E) bf16 (q pre-scaled). wo: (E, E) bf16. bo: (1, E) f32.
    Returns (B, Sq, E) bf16."""
    # TODO(synk): flash-style online softmax over Sk tiles + Sq/head grid tiling before
    # sequence length grows (full (Sq,Sk) f32 scores must fit VMEM here).
    B, Sq, E = qp.shape
    Sk = kp.shape[1]
    head_dim = E // num_heads
    return pl.pallas_call(
        functools.partial(_attn_outproj_kernel, num_heads=num_heads, head_dim=head_dim),
        out_shape=jax.ShapeDtypeStruct((B, Sq, E), ACT_DTYPE),
        grid=(B,),
        in_specs=[
            pl.BlockSpec((1, Sq, E), lambda b: (b, 0, 0)),
            pl.BlockSpec((1, Sk, E), lambda b: (b, 0, 0)),
            pl.BlockSpec((1, Sk, E), lambda b: (b, 0, 0)),
            pl.BlockSpec((E, E), lambda b: (0, 0)),              # out-proj weight resident
            pl.BlockSpec((1, E), lambda b: (0, 0)),
        ],
        out_specs=pl.BlockSpec((1, Sq, E), lambda b: (b, 0, 0)),
        scratch_shapes=[pltpu.VMEM((Sq, E), MATMUL_DTYPE)],
        compiler_params=pltpu.CompilerParams(
            dimension_semantics=("parallel",), vmem_limit_bytes=_VMEM_LIMIT),
    )(qp, kp, vp, wo, bo)


# -------------------- kernel 3: fused MLP + residual + LayerNorm --------------------

def _mlp_residual_ln_kernel(x_ref, res_ref, w1_ref, b1_ref, w2_ref, b2_ref,
                            g_ref, bln_ref, o_ref, *, eps):
    # x: (TM, E) bf16 ; res: (TM, E) f32 ; w1: (E, HID), w2: (HID, E) bf16 resident; biases f32.
    h = jnp.dot(x_ref[...].astype(MATMUL_DTYPE), w1_ref[...],
                preferred_element_type=jnp.float32) + b1_ref[...]
    h = jnp.maximum(h, 0.0)
    # TODO(synk): training-mode dropout(p=0.1) not implemented (inference identity).
    y = jnp.dot(h.astype(MATMUL_DTYPE), w2_ref[...],
                preferred_element_type=jnp.float32) + b2_ref[...]
    y = y + res_ref[...].astype(jnp.float32)
    mean = jnp.mean(y, axis=-1, keepdims=True)
    var = jnp.mean(jnp.square(y - mean), axis=-1, keepdims=True)
    yn = (y - mean) * lax.rsqrt(var + eps)
    o_ref[...] = (yn * g_ref[...] + bln_ref[...]).astype(o_ref.dtype)


def mlp_residual_layernorm(x, residual, w1, b1, w2, b2, gamma, beta, eps=1e-5):
    """x: (N, E) bf16, residual: (N, E) f32 -> LayerNorm(linear2(relu(linear1(x))) + residual),
    f32 output (module contract)."""
    N, E = x.shape
    HID = w1.shape[1]
    tm = _row_tile(N)
    row = pl.BlockSpec((tm, E), lambda i: (i, 0))
    return pl.pallas_call(
        functools.partial(_mlp_residual_ln_kernel, eps=eps),
        out_shape=jax.ShapeDtypeStruct((N, E), jnp.float32),
        grid=(pl.cdiv(N, tm),),
        in_specs=[
            row, row,
            pl.BlockSpec((E, HID), lambda i: (0, 0)),            # W1 resident
            pl.BlockSpec((1, HID), lambda i: (0, 0)),
            pl.BlockSpec((HID, E), lambda i: (0, 0)),            # W2 resident
            pl.BlockSpec((1, E), lambda i: (0, 0)),
            pl.BlockSpec((1, E), lambda i: (0, 0)),
            pl.BlockSpec((1, E), lambda i: (0, 0)),
        ],
        out_specs=pl.BlockSpec((tm, E), lambda i: (i, 0)),
        compiler_params=pltpu.CompilerParams(
            dimension_semantics=("parallel",), vmem_limit_bytes=_VMEM_LIMIT),
    )(x, residual, w1, b1, w2, b2, gamma, beta)


# --------------------------- parameters & forward ---------------------------

def init_params(key, embed_dim, num_heads, hidden_dim):
    assert embed_dim % num_heads == 0
    ks = jax.random.split(key, 8)
    s = 0.05
    return {
        # nn.MultiheadAttention (PyTorch layout: (out, in))
        "in_proj_w": jax.random.normal(ks[0], (3 * embed_dim, embed_dim), jnp.float32) * s,
        "in_proj_b": jax.random.normal(ks[1], (3 * embed_dim,), jnp.float32) * s,
        "out_proj_w": jax.random.normal(ks[2], (embed_dim, embed_dim), jnp.float32) * s,
        "out_proj_b": jax.random.normal(ks[3], (embed_dim,), jnp.float32) * s,
        # linear1 / linear2
        "lin1_w": jax.random.normal(ks[4], (hidden_dim, embed_dim), jnp.float32) * s,
        "lin1_b": jax.random.normal(ks[5], (hidden_dim,), jnp.float32) * s,
        "lin2_w": jax.random.normal(ks[6], (embed_dim, hidden_dim), jnp.float32) * s,
        "lin2_b": jax.random.normal(ks[7], (embed_dim,), jnp.float32) * s,
        # LayerNorm
        "ln_g": jnp.ones((embed_dim,), jnp.float32),
        "ln_b": jnp.zeros((embed_dim,), jnp.float32),
    }


def base_cross_attention_forward(params, q, k, v, num_heads):
    """q, k, v: (B, S, E).  Returns (B, E, S), matching the PyTorch module."""
    B, Sq, E = q.shape
    assert k.shape == v.shape == q.shape, "fused QKV path expects matching q/k/v shapes"
    # TODO(synk): support Sq != Sk by projecting q and (k, v) with separate calls.
    D = E // num_heads
    N = B * Sq

    # --- one-time weight prep (tiny vs activations): (out,in) -> (in,out), bf16 for MXU ---
    scale = 1.0 / math.sqrt(D)
    scale_vec = jnp.array([scale, 1.0, 1.0], jnp.float32).reshape(3, 1, 1)
    w_qkv = params["in_proj_w"].reshape(3, E, E).transpose(0, 2, 1)
    w_qkv = (w_qkv * scale_vec).astype(MATMUL_DTYPE)             # fold 1/sqrt(D) into q proj
    b_qkv = (params["in_proj_b"].reshape(3, 1, E) * scale_vec).astype(jnp.float32)
    wo = params["out_proj_w"].T.astype(MATMUL_DTYPE)             # (E_concat_in, E_out)
    bo = params["out_proj_b"].reshape(1, E).astype(jnp.float32)
    w1 = params["lin1_w"].T.astype(MATMUL_DTYPE)                 # (E, HID)
    b1 = params["lin1_b"].reshape(1, -1).astype(jnp.float32)
    w2 = params["lin2_w"].T.astype(MATMUL_DTYPE)                 # (HID, E)
    b2 = params["lin2_b"].reshape(1, -1).astype(jnp.float32)
    gamma = params["ln_g"].reshape(1, E).astype(jnp.float32)
    beta = params["ln_b"].reshape(1, E).astype(jnp.float32)

    qf = q.reshape(N, E)
    kf = k.reshape(N, E)
    vf = v.reshape(N, E)

    # 1) fused, row-tiled QKV in-projection -> bf16 activations (halves inter-kernel HBM traffic)
    qp, kp, vp = qkv_projection(qf, kf, vf, w_qkv, b_qkv)        # each (N, E) bf16

    # 2) fused attention + merged out-projection; heads live on contiguous lane ranges
    attn = attention_with_outproj(
        qp.reshape(B, Sq, E), kp.reshape(B, Sq, E), vp.reshape(B, Sq, E),
        wo, bo, num_heads)                                       # (B, Sq, E) bf16

    # 3) fused MLP + residual(+ original q, f32) + LayerNorm, row-tiled, weights resident
    y = mlp_residual_layernorm(attn.reshape(N, E), qf, w1, b1, w2, b2, gamma, beta)

    # PyTorch: (S, B, E).permute(1, 2, 0) == (B, E, S).  Kernel output stays lane-dense
    # (E last); the final permute is a cheap XLA transpose of the f32 module output.
    return y.reshape(B, Sq, E).transpose(0, 2, 1)


# ----------------------------------- main -----------------------------------

if __name__ == "__main__":
    B, S, E, H, HID = 2, 8, 32, 4, 64

    key = jax.random.PRNGKey(0)
    kq, kk, kv, kp = jax.random.split(key, 4)
    q = jax.random.normal(kq, (B, S, E), jnp.float32)
    k = jax.random.normal(kk, (B, S, E), jnp.float32)
    v = jax.random.normal(kv, (B, S, E), jnp.float32)

    params = init_params(kp, E, H, HID)

    fwd = jax.jit(functools.partial(base_cross_attention_forward, num_heads=H))
    out = jax.block_until_ready(fwd(params, q, k, v))

    assert out.shape == (B, E, S), out.shape
    assert bool(jnp.all(jnp.isfinite(out)))
    print("KERNEL_OK")
</pallas_src>

<mosaic_0001>
module attributes {stable_mosaic.version = 11 : i64} {
  func.func @_mlp_residual_ln_kernel(%arg0: i32, %arg1: memref<16x32xbf16, #tpu.memory_space<vmem>>, %arg2: memref<16x32xf32, #tpu.memory_space<vmem>>, %arg3: memref<32x64xbf16, #tpu.memory_space<vmem>>, %arg4: memref<1x64xf32, #tpu.memory_space<vmem>>, %arg5: memref<64x32xbf16, #tpu.memory_space<vmem>>, %arg6: memref<1x32xf32, #tpu.memory_space<vmem>>, %arg7: memref<1x32xf32, #tpu.memory_space<vmem>>, %arg8: memref<1x32xf32, #tpu.memory_space<vmem>>, %arg9: memref<16x32xf32, #tpu.memory_space<vmem>>) attributes {dimension_semantics = [#tpu.dimension_semantics<parallel>], iteration_bounds = array<i64: 1>, scalar_prefetch = 0 : i64, scratch_operands = 0 : i64, tpu.core_type = #tpu.core_type<tc>, window_params = [{transform_indices = @transform_0, window_bounds = array<i64: 16, 32>}, {transform_indices = @transform_1, window_bounds = array<i64: 16, 32>}, {pipeline_mode = #tpu.pipeline_mode<synchronous>, transform_indices = @transform_2, window_bounds = array<i64: 32, 64>}, {pipeline_mode = #tpu.pipeline_mode<synchronous>, transform_indices = @transform_3, window_bounds = array<i64: 1, 64>}, {pipeline_mode = #tpu.pipeline_mode<synchronous>, transform_indices = @transform_4, window_bounds = array<i64: 64, 32>}, {pipeline_mode = #tpu.pipeline_mode<synchronous>, transform_indices = @transform_5, window_bounds = array<i64: 1, 32>}, {pipeline_mode = #tpu.pipeline_mode<synchronous>, transform_indices = @transform_6, window_bounds = array<i64: 1, 32>}, {pipeline_mode = #tpu.pipeline_mode<synchronous>, transform_indices = @transform_7, window_bounds = array<i64: 1, 32>}, {transform_indices = @transform_8, window_bounds = array<i64: 16, 32>}]} {
    %c0 = arith.constant 0 : index
    %c0_0 = arith.constant 0 : index
    %0 = vector.load %arg1[%c0, %c0_0] : memref<16x32xbf16, #tpu.memory_space<vmem>>, vector<16x32xbf16>
    %c0_1 = arith.constant 0 : index
    %c0_2 = arith.constant 0 : index
    %1 = vector.load %arg3[%c0_1, %c0_2] : memref<32x64xbf16, #tpu.memory_space<vmem>>, vector<32x64xbf16>
    %cst = arith.constant dense<0.000000e+00> : vector<16x64xf32>
    %2 = tpu.matmul %0, %1, %cst {dimension_numbers = #tpu.dot_dimension_numbers<[1], [0], [0], [1], [0, 0, 1, 1], [], []>} : vector<16x32xbf16>, vector<32x64xbf16>, vector<16x64xf32> -> vector<16x64xf32>
    %c0_3 = arith.constant 0 : index
    %c0_4 = arith.constant 0 : index
    %3 = vector.load %arg4[%c0_3, %c0_4] : memref<1x64xf32, #tpu.memory_space<vmem>>, vector<1x64xf32>
    %4 = vector.broadcast %3 : vector<1x64xf32> to vector<16x64xf32>
    %5 = arith.addf %2, %4 : vector<16x64xf32>
    %cst_5 = arith.constant 0.000000e+00 : f32
    %6 = vector.broadcast %cst_5 : f32 to vector<16x64xf32>
    %7 = arith.maximumf %5, %6 : vector<16x64xf32>
    %8 = arith.truncf %7 : vector<16x64xf32> to vector<16x64xbf16>
    %c0_6 = arith.constant 0 : index
    %c0_7 = arith.constant 0 : index
    %9 = vector.load %arg5[%c0_6, %c0_7] : memref<64x32xbf16, #tpu.memory_space<vmem>>, vector<64x32xbf16>
    %cst_8 = arith.constant dense<0.000000e+00> : vector<16x32xf32>
    %10 = tpu.matmul %8, %9, %cst_8 {dimension_numbers = #tpu.dot_dimension_numbers<[1], [0], [0], [1], [0, 0, 1, 1], [], []>} : vector<16x64xbf16>, vector<64x32xbf16>, vector<16x32xf32> -> vector<16x32xf32>
    %c0_9 = arith.constant 0 : index
    %c0_10 = arith.constant 0 : index
    %11 = vector.load %arg6[%c0_9, %c0_10] : memref<1x32xf32, #tpu.memory_space<vmem>>, vector<1x32xf32>
    %12 = vector.broadcast %11 : vector<1x32xf32> to vector<16x32xf32>
    %13 = arith.addf %10, %12 : vector<16x32xf32>
    %c0_11 = arith.constant 0 : index
    %c0_12 = arith.constant 0 : index
    %14 = vector.load %arg2[%c0_11, %c0_12] : memref<16x32xf32, #tpu.memory_space<vmem>>, vector<16x32xf32>
    %15 = arith.addf %13, %14 : vector<16x32xf32>
    %cst_13 = arith.constant dense<0.000000e+00> : vector<16xf32>
    %16 = vector.multi_reduction <add>, %15, %cst_13 [1] : vector<16x32xf32> to vector<16xf32>
    %17 = vector.shape_cast %16 : vector<16xf32> to vector<16x1xf32>
    %cst_14 = arith.constant 3.200000e+01 : f32
    %18 = vector.broadcast %cst_14 : f32 to vector<16x1xf32>
    %19 = arith.divf %17, %18 : vector<16x1xf32>
    %20 = vector.broadcast %19 : vector<16x1xf32> to vector<16x32xf32>
    %21 = arith.subf %15, %20 : vector<16x32xf32>
    %22 = arith.mulf %21, %21 : vector<16x32xf32>
    %cst_15 = arith.constant dense<0.000000e+00> : vector<16xf32>
    %23 = vector.multi_reduction <add>, %22, %cst_15 [1] : vector<16x32xf32> to vector<16xf32>
    %24 = vector.shape_cast %23 : vector<16xf32> to vector<16x1xf32>
    %cst_16 = arith.constant 3.200000e+01 : f32
    %25 = vector.broadcast %cst_16 : f32 to vector<16x1xf32>
    %26 = arith.divf %24, %25 : vector<16x1xf32>
    %27 = vector.broadcast %19 : vector<16x1xf32> to vector<16x32xf32>
    %28 = arith.subf %15, %27 : vector<16x32xf32>
    %cst_17 = arith.constant 9.99999974E-6 : f32
    %29 = vector.broadcast %cst_17 : f32 to vector<16x1xf32>
    %30 = arith.addf %26, %29 : vector<16x1xf32>
    %31 = math.rsqrt %30 : vector<16x1xf32>
    %32 = vector.broadcast %31 : vector<16x1xf32> to vector<16x32xf32>
    %33 = arith.mulf %28, %32 : vector<16x32xf32>
    %c0_18 = arith.constant 0 : index
    %c0_19 = arith.constant 0 : index
    %34 = vector.load %arg7[%c0_18, %c0_19] : memref<1x32xf32, #tpu.memory_space<vmem>>, vector<1x32xf32>
    %35 = vector.broadcast %34 : vector<1x32xf32> to vector<16x32xf32>
    %36 = arith.mulf %33, %35 : vector<16x32xf32>
    %c0_20 = arith.constant 0 : index
    %c0_21 = arith.constant 0 : index
    %37 = vector.load %arg8[%c0_20, %c0_21] : memref<1x32xf32, #tpu.memory_space<vmem>>, vector<1x32xf32>
    %38 = vector.broadcast %37 : vector<1x32xf32> to vector<16x32xf32>
    %39 = arith.addf %36, %38 : vector<16x32xf32>
    %c0_22 = arith.constant 0 : index
    %c0_23 = arith.constant 0 : index
    %40 = vector.load %arg9[%c0_22, %c0_23] : memref<16x32xf32, #tpu.memory_space<vmem>>, vector<16x32xf32>
    tpu.vector_store %arg9[%c0_22, %c0_23], %39 {strides = array<i32>} : memref<16x32xf32, #tpu.memory_space<vmem>>, vector<16x32xf32>,
    return
  }
  func.func @transform_0(%arg0: i32) -> (i32, i32) {
    %c0_i32 = arith.constant 0 : i32
    %c0_i32_0 = arith.constant 0 : i32
    return %arg0, %c0_i32 : i32, i32
  }
  func.func @transform_1(%arg0: i32) -> (i32, i32) {
    %c0_i32 = arith.constant 0 : i32
    %c0_i32_0 = arith.constant 0 : i32
    return %arg0, %c0_i32 : i32, i32
  }
  func.func @transform_2(%arg0: i32) -> (i32, i32) {
    %c0_i32 = arith.constant 0 : i32
    %c0_i32_0 = arith.constant 0 : i32
    %c0_i32_1 = arith.constant 0 : i32
    return %c0_i32, %c0_i32_0 : i32, i32
  }
  func.func @transform_3(%arg0: i32) -> (i32, i32) {
    %c0_i32 = arith.constant 0 : i32
    %c0_i32_0 = arith.constant 0 : i32
    %c0_i32_1 = arith.constant 0 : i32
    return %c0_i32, %c0_i32_0 : i32, i32
  }
  func.func @transform_4(%arg0: i32) -> (i32, i32) {
    %c0_i32 = arith.constant 0 : i32
    %c0_i32_0 = arith.constant 0 : i32
    %c0_i32_1 = arith.constant 0 : i32
    return %c0_i32, %c0_i32_0 : i32, i32
  }
  func.func @transform_5(%arg0: i32) -> (i32, i32) {
    %c0_i32 = arith.constant 0 : i32
    %c0_i32_0 = arith.constant 0 : i32
    %c0_i32_1 = arith.constant 0 : i32
    return %c0_i32, %c0_i32_0 : i32, i32
  }
  func.func @transform_6(%arg0: i32) -> (i32, i32) {
    %c0_i32 = arith.constant 0 : i32
    %c0_i32_0 = arith.constant 0 : i32
    %c0_i32_1 = arith.constant 0 : i32
    return %c0_i32, %c0_i32_0 : i32, i32
  }
  func.func @transform_7(%arg0: i32) -> (i32, i32) {
    %c0_i32 = arith.constant 0 : i32
    %c0_i32_0 = arith.constant 0 : i32
    %c0_i32_1 = arith.constant 0 : i32
    return %c0_i32, %c0_i32_0 : i32, i32
  }
  func.func @transform_8(%arg0: i32) -> (i32, i32) {
    %c0_i32 = arith.constant 0 : i32
    %c0_i32_0 = arith.constant 0 : i32
    return %arg0, %c0_i32 : i32, i32
  }
}

module attributes {stable_mosaic.version = 11 : i64} {
  func.func @_qkv_proj_kernel(%arg0: i32, %arg1: memref<16x32xf32, #tpu.memory_space<vmem>>, %arg2: memref<16x32xf32, #tpu.memory_space<vmem>>, %arg3: memref<16x32xf32, #tpu.memory_space<vmem>>, %arg4: memref<3x32x32xbf16, #tpu.memory_space<vmem>>, %arg5: memref<3x1x32xf32, #tpu.memory_space<vmem>>, %arg6: memref<16x32xbf16, #tpu.memory_space<vmem>>, %arg7: memref<16x32xbf16, #tpu.memory_space<vmem>>, %arg8: memref<16x32xbf16, #tpu.memory_space<vmem>>) attributes {dimension_semantics = [#tpu.dimension_semantics<parallel>], iteration_bounds = array<i64: 1>, scalar_prefetch = 0 : i64, scratch_operands = 0 : i64, tpu.core_type = #tpu.core_type<tc>, window_params = [{transform_indices = @transform_0, window_bounds = array<i64: 16, 32>}, {transform_indices = @transform_1, window_bounds = array<i64: 16, 32>}, {transform_indices = @transform_2, window_bounds = array<i64: 16, 32>}, {pipeline_mode = #tpu.pipeline_mode<synchronous>, transform_indices = @transform_3, window_bounds = array<i64: 3, 32, 32>}, {pipeline_mode = #tpu.pipeline_mode<synchronous>, transform_indices = @transform_4, window_bounds = array<i64: 3, 1, 32>}, {transform_indices = @transform_5, window_bounds = array<i64: 16, 32>}, {transform_indices = @transform_6, window_bounds = array<i64: 16, 32>}, {transform_indices = @transform_7, window_bounds = array<i64: 16, 32>}]} {
    %c0 = arith.constant 0 : index
    %c0_0 = arith.constant 0 : index
    %0 = vector.load %arg1[%c0, %c0_0] : memref<16x32xf32, #tpu.memory_space<vmem>>, vector<16x32xf32>
    %1 = arith.truncf %0 : vector<16x32xf32> to vector<16x32xbf16>
    %c0_1 = arith.constant 0 : index
    %c0_2 = arith.constant 0 : index
    %c0_3 = arith.constant 0 : index
    %2 = vector.load %arg4[%c0_1, %c0_2, %c0_3] : memref<3x32x32xbf16, #tpu.memory_space<vmem>>, vector<1x32x32xbf16>
    %3 = vector.shape_cast %2 : vector<1x32x32xbf16> to vector<32x32xbf16>
    %cst = arith.constant dense<0.000000e+00> : vector<16x32xf32>
    %4 = tpu.matmul %1, %3, %cst {dimension_numbers = #tpu.dot_dimension_numbers<[1], [0], [0], [1], [0, 0, 1, 1], [], []>} : vector<16x32xbf16>, vector<32x32xbf16>, vector<16x32xf32> -> vector<16x32xf32>
    %c0_4 = arith.constant 0 : index
    %c0_5 = arith.constant 0 : index
    %c0_6 = arith.constant 0 : index
    %5 = vector.load %arg5[%c0_4, %c0_5, %c0_6] : memref<3x1x32xf32, #tpu.memory_space<vmem>>, vector<1x1x32xf32>
    %6 = vector.shape_cast %5 : vector<1x1x32xf32> to vector<1x32xf32>
    %7 = vector.broadcast %6 : vector<1x32xf32> to vector<16x32xf32>
    %8 = arith.addf %4, %7 : vector<16x32xf32>
    %9 = arith.truncf %8 : vector<16x32xf32> to vector<16x32xbf16>
    %c0_7 = arith.constant 0 : index
    %c0_8 = arith.constant 0 : index
    %10 = vector.load %arg6[%c0_7, %c0_8] : memref<16x32xbf16, #tpu.memory_space<vmem>>, vector<16x32xbf16>
    tpu.vector_store %arg6[%c0_7, %c0_8], %9 {strides = array<i32>} : memref<16x32xbf16, #tpu.memory_space<vmem>>, vector<16x32xbf16>,
    %c0_9 = arith.constant 0 : index
    %c0_10 = arith.constant 0 : index
    %11 = vector.load %arg2[%c0_9, %c0_10] : memref<16x32xf32, #tpu.memory_space<vmem>>, vector<16x32xf32>
    %12 = arith.truncf %11 : vector<16x32xf32> to vector<16x32xbf16>
    %c1 = arith.constant 1 : index
    %c0_11 = arith.constant 0 : index
    %c0_12 = arith.constant 0 : index
    %13 = vector.load %arg4[%c1, %c0_11, %c0_12] : memref<3x32x32xbf16, #tpu.memory_space<vmem>>, vector<1x32x32xbf16>
    %14 = vector.shape_cast %13 : vector<1x32x32xbf16> to vector<32x32xbf16>
    %cst_13 = arith.constant dense<0.000000e+00> : vector<16x32xf32>
    %15 = tpu.matmul %12, %14, %cst_13 {dimension_numbers = #tpu.dot_dimension_numbers<[1], [0], [0], [1], [0, 0, 1, 1], [], []>} : vector<16x32xbf16>, vector<32x32xbf16>, vector<16x32xf32> -> vector<16x32xf32>
    %c1_14 = arith.constant 1 : index
    %c0_15 = arith.constant 0 : index
    %c0_16 = arith.constant 0 : index
    %16 = vector.load %arg5[%c1_14, %c0_15, %c0_16] : memref<3x1x32xf32, #tpu.memory_space<vmem>>, vector<1x1x32xf32>
    %17 = vector.shape_cast %16 : vector<1x1x32xf32> to vector<1x32xf32>
    %18 = vector.broadcast %17 : vector<1x32xf32> to vector<16x32xf32>
    %19 = arith.addf %15, %18 : vector<16x32xf32>
    %20 = arith.truncf %19 : vector<16x32xf32> to vector<16x32xbf16>
    %c0_17 = arith.constant 0 : index
    %c0_18 = arith.constant 0 : index
    %21 = vector.load %arg7[%c0_17, %c0_18] : memref<16x32xbf16, #tpu.memory_space<vmem>>, vector<16x32xbf16>
    tpu.vector_store %arg7[%c0_17, %c0_18], %20 {strides = array<i32>} : memref<16x32xbf16, #tpu.memory_space<vmem>>, vector<16x32xbf16>,
    %c0_19 = arith.constant 0 : index
    %c0_20 = arith.constant 0 : index
    %22 = vector.load %arg3[%c0_19, %c0_20] : memref<16x32xf32, #tpu.memory_space<vmem>>, vector<16x32xf32>
    %23 = arith.truncf %22 : vector<16x32xf32> to vector<16x32xbf16>
    %c2 = arith.constant 2 : index
    %c0_21 = arith.constant 0 : index
    %c0_22 = arith.constant 0 : index
    %24 = vector.load %arg4[%c2, %c0_21, %c0_22] : memref<3x32x32xbf16, #tpu.memory_space<vmem>>, vector<1x32x32xbf16>
    %25 = vector.shape_cast %24 : vector<1x32x32xbf16> to vector<32x32xbf16>
    %cst_23 = arith.constant dense<0.000000e+00> : vector<16x32xf32>
    %26 = tpu.matmul %23, %25, %cst_23 {dimension_numbers = #tpu.dot_dimension_numbers<[1], [0], [0], [1], [0, 0, 1, 1], [], []>} : vector<16x32xbf16>, vector<32x32xbf16>, vector<16x32xf32> -> vector<16x32xf32>
    %c2_24 = arith.constant 2 : index
    %c0_25 = arith.constant 0 : index
    %c0_26 = arith.constant 0 : index
    %27 = vector.load %arg5[%c2_24, %c0_25, %c0_26] : memref<3x1x32xf32, #tpu.memory_space<vmem>>, vector<1x1x32xf32>
    %28 = vector.shape_cast %27 : vector<1x1x32xf32> to vector<1x32xf32>
    %29 = vector.broadcast %28 : vector<1x32xf32> to vector<16x32xf32>
    %30 = arith.addf %26, %29 : vector<16x32xf32>
    %31 = arith.truncf %30 : vector<16x32xf32> to vector<16x32xbf16>
    %c0_27 = arith.constant 0 : index
    %c0_28 = arith.constant 0 : index
    %32 = vector.load %arg8[%c0_27, %c0_28] : memref<16x32xbf16, #tpu.memory_space<vmem>>, vector<16x32xbf16>
    tpu.vector_store %arg8[%c0_27, %c0_28], %31 {strides = array<i32>} : memref<16x32xbf16, #tpu.memory_space<vmem>>, vector<16x32xbf16>,
    return
  }
  func.func @transform_0(%arg0: i32) -> (i32, i32) {
    %c0_i32 = arith.constant 0 : i32
    %c0_i32_0 = arith.constant 0 : i32
    return %arg0, %c0_i32 : i32, i32
  }
  func.func @transform_1(%arg0: i32) -> (i32, i32) {
    %c0_i32 = arith.constant 0 : i32
    %c0_i32_0 = arith.constant 0 : i32
    return %arg0, %c0_i32 : i32, i32
  }
  func.func @transform_2(%arg0: i32) -> (i32, i32) {
    %c0_i32 = arith.constant 0 : i32
    %c0_i32_0 = arith.constant 0 : i32
    return %arg0, %c0_i32 : i32, i32
  }
  func.func @transform_3(%arg0: i32) -> (i32, i32, i32) {
    %c0_i32 = arith.constant 0 : i32
    %c0_i32_0 = arith.constant 0 : i32
    %c0_i32_1 = arith.constant 0 : i32
    %c0_i32_2 = arith.constant 0 : i32
    return %c0_i32, %c0_i32_0, %c0_i32_1 : i32, i32, i32
  }
  func.func @transform_4(%arg0: i32) -> (i32, i32, i32) {
    %c0_i32 = arith.constant 0 : i32
    %c0_i32_0 = arith.constant 0 : i32
    %c0_i32_1 = arith.constant 0 : i32
    %c0_i32_2 = arith.constant 0 : i32
    return %c0_i32, %c0_i32_0, %c0_i32_1 : i32, i32, i32
  }
  func.func @transform_5(%arg0: i32) -> (i32, i32) {
    %c0_i32 = arith.constant 0 : i32
    %c0_i32_0 = arith.constant 0 : i32
    return %arg0, %c0_i32 : i32, i32
  }
  func.func @transform_6(%arg0: i32) -> (i32, i32) {
    %c0_i32 = arith.constant 0 : i32
    %c0_i32_0 = arith.constant 0 : i32
    return %arg0, %c0_i32 : i32, i32
  }
  func.func @transform_7(%arg0: i32) -> (i32, i32) {
    %c0_i32 = arith.constant 0 : i32
    %c0_i32_0 = arith.constant 0 : i32
    return %arg0, %c0_i32 : i32, i32
  }
}

module attributes {stable_mosaic.version = 11 : i64} {
  func.func @_attn_outproj_kernel(%arg0: i32, %arg1: memref<1x8x32xbf16, #tpu.memory_space<vmem>>, %arg2: memref<1x8x32xbf16, #tpu.memory_space<vmem>>, %arg3: memref<1x8x32xbf16, #tpu.memory_space<vmem>>, %arg4: memref<32x32xbf16, #tpu.memory_space<vmem>>, %arg5: memref<1x32xf32, #tpu.memory_space<vmem>>, %arg6: memref<1x8x32xbf16, #tpu.memory_space<vmem>>, %arg7: memref<8x32xbf16, #tpu.memory_space<vmem>>) attributes {dimension_semantics = [#tpu.dimension_semantics<parallel>], iteration_bounds = array<i64: 2>, scalar_prefetch = 0 : i64, scratch_operands = 1 : i64, tpu.core_type = #tpu.core_type<tc>, window_params = [{transform_indices = @transform_0, window_bounds = array<i64: 1, 8, 32>}, {transform_indices = @transform_1, window_bounds = array<i64: 1, 8, 32>}, {transform_indices = @transform_2, window_bounds = array<i64: 1, 8, 32>}, {pipeline_mode = #tpu.pipeline_mode<synchronous>, transform_indices = @transform_3, window_bounds = array<i64: 32, 32>}, {pipeline_mode = #tpu.pipeline_mode<synchronous>, transform_indices = @transform_4, window_bounds = array<i64: 1, 32>}, {transform_indices = @transform_5, window_bounds = array<i64: 1, 8, 32>}]} {
    %c0 = arith.constant 0 : index
    %c0_0 = arith.constant 0 : index
    %c0_1 = arith.constant 0 : index
    %0 = vector.load %arg1[%c0, %c0_0, %c0_1] : memref<1x8x32xbf16, #tpu.memory_space<vmem>>, vector<1x8x8xbf16>
    %1 = vector.shape_cast %0 : vector<1x8x8xbf16> to vector<8x8xbf16>
    %c0_2 = arith.constant 0 : index
    %c0_3 = arith.constant 0 : index
    %c0_4 = arith.constant 0 : index
    %2 = vector.load %arg2[%c0_2, %c0_3, %c0_4] : memref<1x8x32xbf16, #tpu.memory_space<vmem>>, vector<1x8x8xbf16>
    %3 = vector.shape_cast %2 : vector<1x8x8xbf16> to vector<8x8xbf16>
    %c0_5 = arith.constant 0 : index
    %c0_6 = arith.constant 0 : index
    %c0_7 = arith.constant 0 : index
    %4 = vector.load %arg3[%c0_5, %c0_6, %c0_7] : memref<1x8x32xbf16, #tpu.memory_space<vmem>>, vector<1x8x8xbf16>
    %5 = vector.shape_cast %4 : vector<1x8x8xbf16> to vector<8x8xbf16>
    %cst = arith.constant dense<0.000000e+00> : vector<8x8xf32>
    %6 = tpu.matmul %1, %3, %cst {dimension_numbers = #tpu.dot_dimension_numbers<[1], [1], [0], [0], [0, 0, 1, 0], [], []>} : vector<8x8xbf16>, vector<8x8xbf16>, vector<8x8xf32> -> vector<8x8xf32>
    %cst_8 = arith.constant dense<0xFF800000> : vector<8xf32>
    %7 = vector.multi_reduction <maximumf>, %6, %cst_8 [1] : vector<8x8xf32> to vector<8xf32>
    %8 = vector.shape_cast %7 : vector<8xf32> to vector<8x1xf32>
    %9 = vector.broadcast %8 : vector<8x1xf32> to vector<8x8xf32>
    %10 = arith.subf %6, %9 : vector<8x8xf32>
    %11 = math.exp %10 : vector<8x8xf32>
    %cst_9 = arith.constant dense<0.000000e+00> : vector<8xf32>
    %12 = vector.multi_reduction <add>, %11, %cst_9 [1] : vector<8x8xf32> to vector<8xf32>
    %13 = vector.shape_cast %12 : vector<8xf32> to vector<8x1xf32>
    %14 = arith.truncf %11 : vector<8x8xf32> to vector<8x8xbf16>
    %cst_10 = arith.constant dense<0.000000e+00> : vector<8x8xf32>
    %15 = tpu.matmul %14, %5, %cst_10 {dimension_numbers = #tpu.dot_dimension_numbers<[1], [0], [0], [1], [0, 0, 1, 1], [], []>} : vector<8x8xbf16>, vector<8x8xbf16>, vector<8x8xf32> -> vector<8x8xf32>
    %16 = tpu.reciprocal %13 {approx = true} : vector<8x1xf32> -> vector<8x1xf32>
    %17 = vector.broadcast %16 : vector<8x1xf32> to vector<8x8xf32>
    %18 = arith.mulf %15, %17 : vector<8x8xf32>
    %19 = arith.truncf %18 : vector<8x8xf32> to vector<8x8xbf16>
    %c0_11 = arith.constant 0 : index
    %c0_12 = arith.constant 0 : index
    %20 = vector.load %arg7[%c0_11, %c0_12] : memref<8x32xbf16, #tpu.memory_space<vmem>>, vector<8x8xbf16>
    tpu.vector_store %arg7[%c0_11, %c0_12], %19 {strides = array<i32>} : memref<8x32xbf16, #tpu.memory_space<vmem>>, vector<8x8xbf16>,
    %c0_13 = arith.constant 0 : index
    %c0_14 = arith.constant 0 : index
    %c8 = arith.constant 8 : index
    %21 = vector.load %arg1[%c0_13, %c0_14, %c8] : memref<1x8x32xbf16, #tpu.memory_space<vmem>>, vector<1x8x8xbf16>
    %22 = vector.shape_cast %21 : vector<1x8x8xbf16> to vector<8x8xbf16>
    %c0_15 = arith.constant 0 : index
    %c0_16 = arith.constant 0 : index
    %c8_17 = arith.constant 8 : index
    %23 = vector.load %arg2[%c0_15, %c0_16, %c8_17] : memref<1x8x32xbf16, #tpu.memory_space<vmem>>, vector<1x8x8xbf16>
    %24 = vector.shape_cast %23 : vector<1x8x8xbf16> to vector<8x8xbf16>
    %c0_18 = arith.constant 0 : index
    %c0_19 = arith.constant 0 : index
    %c8_20 = arith.constant 8 : index
    %25 = vector.load %arg3[%c0_18, %c0_19, %c8_20] : memref<1x8x32xbf16, #tpu.memory_space<vmem>>, vector<1x8x8xbf16>
    %26 = vector.shape_cast %25 : vector<1x8x8xbf16> to vector<8x8xbf16>
    %cst_21 = arith.constant dense<0.000000e+00> : vector<8x8xf32>
    %27 = tpu.matmul %22, %24, %cst_21 {dimension_numbers = #tpu.dot_dimension_numbers<[1], [1], [0], [0], [0, 0, 1, 0], [], []>} : vector<8x8xbf16>, vector<8x8xbf16>, vector<8x8xf32> -> vector<8x8xf32>
    %cst_22 = arith.constant dense<0xFF800000> : vector<8xf32>
    %28 = vector.multi_reduction <maximumf>, %27, %cst_22 [1] : vector<8x8xf32> to vector<8xf32>
    %29 = vector.shape_cast %28 : vector<8xf32> to vector<8x1xf32>
    %30 = vector.broadcast %29 : vector<8x1xf32> to vector<8x8xf32>
    %31 = arith.subf %27, %30 : vector<8x8xf32>
    %32 = math.exp %31 : vector<8x8xf32>
    %cst_23 = arith.constant dense<0.000000e+00> : vector<8xf32>
    %33 = vector.multi_reduction <add>, %32, %cst_23 [1] : vector<8x8xf32> to vector<8xf32>
    %34 = vector.shape_cast %33 : vector<8xf32> to vector<8x1xf32>
    %35 = arith.truncf %32 : vector<8x8xf32> to vector<8x8xbf16>
    %cst_24 = arith.constant dense<0.000000e+00> : vector<8x8xf32>
    %36 = tpu.matmul %35, %26, %cst_24 {dimension_numbers = #tpu.dot_dimension_numbers<[1], [0], [0], [1], [0, 0, 1, 1], [], []>} : vector<8x8xbf16>, vector<8x8xbf16>, vector<8x8xf32> -> vector<8x8xf32>
    %37 = tpu.reciprocal %34 {approx = true} : vector<8x1xf32> -> vector<8x1xf32>
    %38 = vector.broadcast %37 : vector<8x1xf32> to vector<8x8xf32>
    %39 = arith.mulf %36, %38 : vector<8x8xf32>
    %40 = arith.truncf %39 : vector<8x8xf32> to vector<8x8xbf16>
    %c0_25 = arith.constant 0 : index
    %c8_26 = arith.constant 8 : index
    %41 = vector.load %arg7[%c0_25, %c8_26] : memref<8x32xbf16, #tpu.memory_space<vmem>>, vector<8x8xbf16>
    tpu.vector_store %arg7[%c0_25, %c8_26], %40 {strides = array<i32>} : memref<8x32xbf16, #tpu.memory_space<vmem>>, vector<8x8xbf16>,
    %c0_27 = arith.constant 0 : index
    %c0_28 = arith.constant 0 : index
    %c16 = arith.constant 16 : index
    %42 = vector.load %arg1[%c0_27, %c0_28, %c16] : memref<1x8x32xbf16, #tpu.memory_space<vmem>>, vector<1x8x8xbf16>
    %43 = vector.shape_cast %42 : vector<1x8x8xbf16> to vector<8x8xbf16>
    %c0_29 = arith.constant 0 : index
    %c0_30 = arith.constant 0 : index
    %c16_31 = arith.constant 16 : index
    %44 = vector.load %arg2[%c0_29, %c0_30, %c16_31] : memref<1x8x32xbf16, #tpu.memory_space<vmem>>, vector<1x8x8xbf16>
    %45 = vector.shape_cast %44 : vector<1x8x8xbf16> to vector<8x8xbf16>
    %c0_32 = arith.constant 0 : index
    %c0_33 = arith.constant 0 : index
    %c16_34 = arith.constant 16 : index
    %46 = vector.load %arg3[%c0_32, %c0_33, %c16_34] : memref<1x8x32xbf16, #tpu.memory_space<vmem>>, vector<1x8x8xbf16>
    %47 = vector.shape_cast %46 : vector<1x8x8xbf16> to vector<8x8xbf16>
    %cst_35 = arith.constant dense<0.000000e+00> : vector<8x8xf32>
    %48 = tpu.matmul %43, %45, %cst_35 {dimension_numbers = #tpu.dot_dimension_numbers<[1], [1], [0], [0], [0, 0, 1, 0], [], []>} : vector<8x8xbf16>, vector<8x8xbf16>, vector<8x8xf32> -> vector<8x8xf32>
    %cst_36 = arith.constant dense<0xFF800000> : vector<8xf32>
    %49 = vector.multi_reduction <maximumf>, %48, %cst_36 [1] : vector<8x8xf32> to vector<8xf32>
    %50 = vector.shape_cast %49 : vector<8xf32> to vector<8x1xf32>
    %51 = vector.broadcast %50 : vector<8x1xf32> to vector<8x8xf32>
    %52 = arith.subf %48, %51 : vector<8x8xf32>
    %53 = math.exp %52 : vector<8x8xf32>
    %cst_37 = arith.constant dense<0.000000e+00> : vector<8xf32>
    %54 = vector.multi_reduction <add>, %53, %cst_37 [1] : vector<8x8xf32> to vector<8xf32>
    %55 = vector.shape_cast %54 : vector<8xf32> to vector<8x1xf32>
    %56 = arith.truncf %53 : vector<8x8xf32> to vector<8x8xbf16>
    %cst_38 = arith.constant dense<0.000000e+00> : vector<8x8xf32>
    %57 = tpu.matmul %56, %47, %cst_38 {dimension_numbers = #tpu.dot_dimension_numbers<[1], [0], [0], [1], [0, 0, 1, 1], [], []>} : vector<8x8xbf16>, vector<8x8xbf16>, vector<8x8xf32> -> vector<8x8xf32>
    %58 = tpu.reciprocal %55 {approx = true} : vector<8x1xf32> -> vector<8x1xf32>
    %59 = vector.broadcast %58 : vector<8x1xf32> to vector<8x8xf32>
    %60 = arith.mulf %57, %59 : vector<8x8xf32>
    %61 = arith.truncf %60 : vector<8x8xf32> to vector<8x8xbf16>
    %c0_39 = arith.constant 0 : index
    %c16_40 = arith.constant 16 : index
    %62 = vector.load %arg7[%c0_39, %c16_40] : memref<8x32xbf16, #tpu.memory_space<vmem>>, vector<8x8xbf16>
    tpu.vector_store %arg7[%c0_39, %c16_40], %61 {strides = array<i32>} : memref<8x32xbf16, #tpu.memory_space<vmem>>, vector<8x8xbf16>,
    %c0_41 = arith.constant 0 : index
    %c0_42 = arith.constant 0 : index
    %c24 = arith.constant 24 : index
    %63 = vector.load %arg1[%c0_41, %c0_42, %c24] : memref<1x8x32xbf16, #tpu.memory_space<vmem>>, vector<1x8x8xbf16>
    %64 = vector.shape_cast %63 : vector<1x8x8xbf16> to vector<8x8xbf16>
    %c0_43 = arith.constant 0 : index
    %c0_44 = arith.constant 0 : index
    %c24_45 = arith.constant 24 : index
    %65 = vector.load %arg2[%c0_43, %c0_44, %c24_45] : memref<1x8x32xbf16, #tpu.memory_space<vmem>>, vector<1x8x8xbf16>
    %66 = vector.shape_cast %65 : vector<1x8x8xbf16> to vector<8x8xbf16>
    %c0_46 = arith.constant 0 : index
    %c0_47 = arith.constant 0 : index
    %c24_48 = arith.constant 24 : index
    %67 = vector.load %arg3[%c0_46, %c0_47, %c24_48] : memref<1x8x32xbf16, #tpu.memory_space<vmem>>, vector<1x8x8xbf16>
    %68 = vector.shape_cast %67 : vector<1x8x8xbf16> to vector<8x8xbf16>
    %cst_49 = arith.constant dense<0.000000e+00> : vector<8x8xf32>
    %69 = tpu.matmul %64, %66, %cst_49 {dimension_numbers = #tpu.dot_dimension_numbers<[1], [1], [0], [0], [0, 0, 1, 0], [], []>} : vector<8x8xbf16>, vector<8x8xbf16>, vector<8x8xf32> -> vector<8x8xf32>
    %cst_50 = arith.constant dense<0xFF800000> : vector<8xf32>
    %70 = vector.multi_reduction <maximumf>, %69, %cst_50 [1] : vector<8x8xf32> to vector<8xf32>
    %71 = vector.shape_cast %70 : vector<8xf32> to vector<8x1xf32>
    %72 = vector.broadcast %71 : vector<8x1xf32> to vector<8x8xf32>
    %73 = arith.subf %69, %72 : vector<8x8xf32>
    %74 = math.exp %73 : vector<8x8xf32>
    %cst_51 = arith.constant dense<0.000000e+00> : vector<8xf32>
    %75 = vector.multi_reduction <add>, %74, %cst_51 [1] : vector<8x8xf32> to vector<8xf32>
    %76 = vector.shape_cast %75 : vector<8xf32> to vector<8x1xf32>
    %77 = arith.truncf %74 : vector<8x8xf32> to vector<8x8xbf16>
    %cst_52 = arith.constant dense<0.000000e+00> : vector<8x8xf32>
    %78 = tpu.matmul %77, %68, %cst_52 {dimension_numbers = #tpu.dot_dimension_numbers<[1], [0], [0], [1], [0, 0, 1, 1], [], []>} : vector<8x8xbf16>, vector<8x8xbf16>, vector<8x8xf32> -> vector<8x8xf32>
    %79 = tpu.reciprocal %76 {approx = true} : vector<8x1xf32> -> vector<8x1xf32>
    %80 = vector.broadcast %79 : vector<8x1xf32> to vector<8x8xf32>
    %81 = arith.mulf %78, %80 : vector<8x8xf32>
    %82 = arith.truncf %81 : vector<8x8xf32> to vector<8x8xbf16>
    %c0_53 = arith.constant 0 : index
    %c24_54 = arith.constant 24 : index
    %83 = vector.load %arg7[%c0_53, %c24_54] : memref<8x32xbf16, #tpu.memory_space<vmem>>, vector<8x8xbf16>
    tpu.vector_store %arg7[%c0_53, %c24_54], %82 {strides = array<i32>} : memref<8x32xbf16, #tpu.memory_space<vmem>>, vector<8x8xbf16>,
    %c0_55 = arith.constant 0 : index
    %c0_56 = arith.constant 0 : index
    %84 = vector.load %arg7[%c0_55, %c0_56] : memref<8x32xbf16, #tpu.memory_space<vmem>>, vector<8x32xbf16>
    %c0_57 = arith.constant 0 : index
    %c0_58 = arith.constant 0 : index
    %85 = vector.load %arg4[%c0_57, %c0_58] : memref<32x32xbf16, #tpu.memory_space<vmem>>, vector<32x32xbf16>
    %cst_59 = arith.constant dense<0.000000e+00> : vector<8x32xf32>
    %86 = tpu.matmul %84, %85, %cst_59 {dimension_numbers = #tpu.dot_dimension_numbers<[1], [0], [0], [1], [0, 0, 1, 1], [], []>} : vector<8x32xbf16>, vector<32x32xbf16>, vector<8x32xf32> -> vector<8x32xf32>
    %c0_60 = arith.constant 0 : index
    %c0_61 = arith.constant 0 : index
    %87 = vector.load %arg5[%c0_60, %c0_61] : memref<1x32xf32, #tpu.memory_space<vmem>>, vector<1x32xf32>
    %88 = vector.broadcast %87 : vector<1x32xf32> to vector<8x32xf32>
    %89 = arith.addf %86, %88 : vector<8x32xf32>
    %90 = arith.truncf %89 : vector<8x32xf32> to vector<8x32xbf16>
    %c0_62 = arith.constant 0 : index
    %c0_63 = arith.constant 0 : index
    %c0_64 = arith.constant 0 : index
    %91 = vector.load %arg6[%c0_62, %c0_63, %c0_64] : memref<1x8x32xbf16, #tpu.memory_space<vmem>>, vector<1x8x32xbf16>
    %92 = vector.shape_cast %91 : vector<1x8x32xbf16> to vector<8x32xbf16>
    %93 = vector.shape_cast %90 : vector<8x32xbf16> to vector<1x8x32xbf16>
    tpu.vector_store %arg6[%c0_62, %c0_63, %c0_64], %93 {strides = array<i32>} : memref<1x8x32xbf16, #tpu.memory_space<vmem>>, vector<1x8x32xbf16>,
    return
  }
  func.func @transform_0(%arg0: i32) -> (i32, i32, i32) {
    %c0_i32 = arith.constant 0 : i32
    %c0_i32_0 = arith.constant 0 : i32
    %c0_i32_1 = arith.constant 0 : i32
    return %arg0, %c0_i32, %c0_i32_0 : i32, i32, i32
  }
  func.func @transform_1(%arg0: i32) -> (i32, i32, i32) {
    %c0_i32 = arith.constant 0 : i32
    %c0_i32_0 = arith.constant 0 : i32
    %c0_i32_1 = arith.constant 0 : i32
    return %arg0, %c0_i32, %c0_i32_0 : i32, i32, i32
  }
  func.func @transform_2(%arg0: i32) -> (i32, i32, i32) {
    %c0_i32 = arith.constant 0 : i32
    %c0_i32_0 = arith.constant 0 : i32
    %c0_i32_1 = arith.constant 0 : i32
    return %arg0, %c0_i32, %c0_i32_0 : i32, i32, i32
  }
  func.func @transform_3(%arg0: i32) -> (i32, i32) {
    %c0_i32 = arith.constant 0 : i32
    %c0_i32_0 = arith.constant 0 : i32
    %c0_i32_1 = arith.constant 0 : i32
    return %c0_i32, %c0_i32_0 : i32, i32
  }
  func.func @transform_4(%arg0: i32) -> (i32, i32) {
    %c0_i32 = arith.constant 0 : i32
    %c0_i32_0 = arith.constant 0 : i32
    %c0_i32_1 = arith.constant 0 : i32
    return %c0_i32, %c0_i32_0 : i32, i32
  }
  func.func @transform_5(%arg0: i32) -> (i32, i32, i32) {
    %c0_i32 = arith.constant 0 : i32
    %c0_i32_0 = arith.constant 0 : i32
    %c0_i32_1 = arith.constant 0 : i32
    return %arg0, %c0_i32, %c0_i32_0 : i32, i32, i32
  }
}

</mosaic_0001>

<llo_original>
// kernel: base_cross_attention_forward.5
$region0: #{base_cross_attention_forward.5}
  #allocation0 [shape = 'u32[]', space=smem, size = 0x4, offset = 0x4, fixed_abs, tag = 'smem constant byte address 0x4 - core index']
  #allocation1 [shape = 'u32[144,128]{1,0:T(1,128)}', space=vmem, size = 0x12000, scoped, tag = 'internal scratch']
  %s0 = inlined_call_operand.vmem [shape: bf16[16,32], index: 0, kind: input, shape index: {}]
  %s1 = inlined_call_operand.vmem [shape: f32[16,32], index: 1, kind: input, shape index: {}]
  %s2 = inlined_call_operand.vmem [shape: bf16[32,64], index: 2, kind: input, shape index: {}]
  %s3 = inlined_call_operand.vmem [shape: f32[1,64], index: 3, kind: input, shape index: {}]
  %s4 = inlined_call_operand.vmem [shape: bf16[64,32], index: 4, kind: input, shape index: {}]
  %s5 = inlined_call_operand.vmem [shape: f32[1,32], index: 5, kind: input, shape index: {}]
  %s6 = inlined_call_operand.vmem [shape: f32[1,32], index: 6, kind: input, shape index: {}]
  %s7 = inlined_call_operand.vmem [shape: f32[1,32], index: 7, kind: input, shape index: {}]
  %s8 = inlined_call_operand.hbm [shape: f32[16,32], index: 8, kind: output, shape index: {}]
  %s9 = sld [smem:[#allocation0]]
  $region42: #{base_cross_attention_forward.5} parent=0
    _
  %s11 = ssub.s32 1, %s9
  %s12 = scalar_select 0, %s11, %s9
  $region1: #{base_cross_attention_forward.5} parent=0
    #allocation2 [shape = 'u8[8192]{0}', space=vmem, size = 0x2000, scoped, tag = 'output window, operand 0, single buffered']
    #allocation3 [shape = 's32[1]{0}', space=sflag, size = 0x4, scoped, tag = 'scoped memory for base_cross_attention_forward.5']
    %13 = vsyncpa [#allocation3], 0
    // Predicated region
    $region2: #{base_cross_attention_forward.5} parent=1 // pred_check
      _
    $region3: #{base_cross_attention_forward.5} parent=1 // pred_check_branch
      %15 = sbr.rel (0) target = $region5
    $region4: #{base_cross_attention_forward.5} parent=1 // pred_region
      _
    $region5: #{base_cross_attention_forward.5} parent=1 // pred_fallthru
      _
    // Predicated region
    $region6: #{base_cross_attention_forward.5} parent=1 // pred_check
      _
    $region7: #{base_cross_attention_forward.5} parent=1 // pred_check_branch
      %17 = sbr.rel (0) target = $region9
    $region8: #{base_cross_attention_forward.5} parent=1 // pred_region
      _
    $region9: #{base_cross_attention_forward.5} parent=1 // pred_fallthru
      _
    // Predicated region
    $region10: #{base_cross_attention_forward.5} parent=1 // pred_check
      _
    $region11: #{base_cross_attention_forward.5} parent=1 // pred_check_branch
      %19 = sbr.rel (0) target = $region13
    $region12: #{base_cross_attention_forward.5} parent=1 // pred_region
      _
    $region13: #{base_cross_attention_forward.5} parent=1 // pred_fallthru
      _
    // Predicated region
    $region14: #{base_cross_attention_forward.5} parent=1 // pred_check
      _
    $region15: #{base_cross_attention_forward.5} parent=1 // pred_check_branch
      %21 = sbr.rel (0) target = $region17
    $region16: #{base_cross_attention_forward.5} parent=1 // pred_region
      _
    $region17: #{base_cross_attention_forward.5} parent=1 // pred_fallthru
      _
    // Predicated region
    $region18: #{base_cross_attention_forward.5} parent=1 // pred_check
      _
    $region19: #{base_cross_attention_forward.5} parent=1 // pred_check_branch
      %23 = sbr.rel (0) target = $region21
    $region20: #{base_cross_attention_forward.5} parent=1 // pred_region
      _
    $region21: #{base_cross_attention_forward.5} parent=1 // pred_fallthru
      _
    // Predicated region
    $region22: #{base_cross_attention_forward.5} parent=1 // pred_check
      _
    $region23: #{base_cross_attention_forward.5} parent=1 // pred_check_branch
      %25 = sbr.rel (0) target = $region25
    $region24: #{base_cross_attention_forward.5} parent=1 // pred_region
      _
    $region25: #{base_cross_attention_forward.5} parent=1 // pred_fallthru
      _
    // Predicated region
    $region26: #{base_cross_attention_forward.5} parent=1 // pred_check
      _
    $region27: #{base_cross_attention_forward.5} parent=1 // pred_check_branch
      %27 = sbr.rel (0) target = $region29
    $region28: #{base_cross_attention_forward.5} parent=1 // pred_region
      _
    $region29: #{base_cross_attention_forward.5} parent=1 // pred_fallthru
      _
    // Predicated region
    $region30: #{base_cross_attention_forward.5} parent=1 // pred_check
      _
    $region31: #{base_cross_attention_forward.5} parent=1 // pred_check_branch
      %29 = sbr.rel (0) target = $region33
    $region32: #{base_cross_attention_forward.5} parent=1 // pred_region
      _
    $region33: #{base_cross_attention_forward.5} parent=1 // pred_fallthru
      _
    %v31 = vld [vmem:[%s0] sm:$0xf]
    %v32 = vld [vmem:[%s0 + $0x4] sm:$0xf]
    %v33 = vld [vmem:[%s2] sm:$0xf]
    %v34 = vld [vmem:[%s2 + $0x4] sm:$0xf]
    %v35 = vld [vmem:[%s2 + $0x8] sm:$0xf]
    %v36 = vld [vmem:[%s2 + $0xc] sm:$0xf]
    %v37 = vld [vmem:[%s3] sm:$0x1]
    %v39 = vlaneseq
    %v40 = vshrl.u32 %v39, 7
    %v41 = vsub.s32 0, %v40
    %v42 = vrot.slane %v37, %v41
    %v46 = vunpack.c.l.b16 %v31
    %v47 = vunpack.c.l.b16 %v32
    %v48 = vpack.c.b16 %v47, %v46
    %v53 = vunpack.c.l.b16 %v33
    %v54 = vunpack.c.l.b16 %v34
    %v55 = vunpack.c.l.b16 %v35
    %v56 = vunpack.c.l.b16 %v36
    %v57 = vpack.c.b16 %v54, %v53
    %v58 = vpack.c.b16 %v56, %v55
    %vm61 = vcmask 261120
    %v63 = vsel %vm61, %v48, 0
    %65 = vmatprep.subr.bf16.mxu0 0
    %66 = vmatpush1.bf16.msra.mxu0 0
    %67 = vmatprep.subr.bf16.mxu0 0
    %68 = vmatpush1.bf16.msra.mxu0 0
    %69 = vmatprep.subr.bf16.mxu0 0
    %70 = vmatpush1.bf16.msra.mxu0 0
    %71 = vmatprep.subr.bf16.mxu0 0
    %72 = vmatpush1.bf16.msra.mxu0 0
    %73 = vmatprep.subr.bf16.mxu0 0
    %74 = vmatpush1.bf16.msra.mxu0 0
    %75 = vmatprep.subr.bf16.mxu0 0
    %76 = vmatpush1.bf16.msra.mxu0 0
    %77 = vmatprep.subr.bf16.mxu0 0
    %78 = vmatpush1.bf16.msra.mxu0 %v58
    %79 = vmatprep.subr.bf16.mxu0 0
    %80 = vmatpush1.bf16.msra.mxu0 %v57
    %81 = vmatprep.subr.bf16.mxu0 0
    %82 = vmatpush2.bf16.msra.mxu0 0
    %83 = vmatprep.subr.bf16.mxu0 0
    %84 = vmatpush2.bf16.msra.mxu0 0
    %85 = vmatprep.subr.bf16.mxu0 0
    %86 = vmatpush2.bf16.msra.mxu0 0
    %87 = vmatprep.subr.bf16.mxu0 0
    %88 = vmatpush2.bf16.msra.mxu0 0
    %89 = vmatprep.subr.bf16.mxu0 0
    %90 = vmatpush2.bf16.msra.mxu0 0
    %91 = vmatprep.subr.bf16.mxu0 0
    %92 = vmatpush2.bf16.msra.mxu0 0
    %93 = vmatprep.subr.bf16.mxu0 0
    %94 = vmatpush2.bf16.msra.mxu0 0
    %95 = vmatprep.subr.bf16.mxu0 0
    %96 = vmatpush2.bf16.msra.mxu0 0
    %97 = vmatprep.mubr.bf16.mxu0 0
    %98 = vmatmul.mubr.bf16.gmra.mxu0 %v63
    %v99 = vpop.f32.mrf.mxu0
    %v100 = vadd.f32 %v42, %v99
    %v101 = vpop.f32.mrf.mxu0
    %v102 = vpop.f32.mrf.mxu0
    %v103 = vadd.f32 %v42, %v102
    %v104 = vpop.f32.mrf.mxu0
    %105 = vdwg.mxu0
    %v106 = vmax.f32 %v100, 0.0
    %v107 = vmax.f32 %v103, 0.0
    %v108 = vpack.c.bf16 %v107, %v106
    %v109 = vld [vmem:[%s4] sm:$0xf]
    %v110 = vld [vmem:[%s4 + $0x4] sm:$0xf]
    %v111 = vld [vmem:[%s4 + $0x8] sm:$0xf]
    %v112 = vld [vmem:[%s4 + $0xc] sm:$0xf]
    %v113 = vld [vmem:[%s4 + $0x10] sm:$0xf]
    %v114 = vld [vmem:[%s4 + $0x14] sm:$0xf]
    %v115 = vld [vmem:[%s4 + $0x18] sm:$0xf]
    %v116 = vld [vmem:[%s4 + $0x1c] sm:$0xf]
    %v117 = vld [vmem:[%s5] sm:$0x1]
    %v119 = vlaneseq
    %v120 = vshrl.u32 %v119, 7
    %v121 = vsub.s32 0, %v120
    %v122 = vrot.slane %v117, %v121
    %v132 = vunpack.c.l.b16 %v109
    %v133 = vunpack.c.l.b16 %v110
    %v134 = vunpack.c.l.b16 %v111
    %v135 = vunpack.c.l.b16 %v112
    %v136 = vunpack.c.l.b16 %v113
    %v137 = vunpack.c.l.b16 %v114
    %v138 = vunpack.c.l.b16 %v115
    %v139 = vunpack.c.l.b16 %v116
    %v140 = vpack.c.b16 %v133, %v132
    %v141 = vpack.c.b16 %v135, %v134
    %v142 = vpack.c.b16 %v137, %v136
    %v143 = vpack.c.b16 %v139, %v138
    %vm148 = vcmask 523264
    %v150 = vsel %vm148, %v108, 0
    %152 = vmatprep.subr.bf16.mxu0 0
    %153 = vmatpush1.bf16.msra.mxu0 0
    %154 = vmatprep.subr.bf16.mxu0 0
    %155 = vmatpush1.bf16.msra.mxu0 0
    %156 = vmatprep.subr.bf16.mxu0 0
    %157 = vmatpush1.bf16.msra.mxu0 0
    %158 = vmatprep.subr.bf16.mxu0 0
    %159 = vmatpush1.bf16.msra.mxu0 0
    %160 = vmatprep.subr.bf16.mxu0 0
    %161 = vmatpush1.bf16.msra.mxu0 %v143
    %162 = vmatprep.subr.bf16.mxu0 0
    %163 = vmatpush1.bf16.msra.mxu0 %v142
    %164 = vmatprep.subr.bf16.mxu0 0
    %165 = vmatpush1.bf16.msra.mxu0 %v141
    %166 = vmatprep.subr.bf16.mxu0 0
    %167 = vmatpush1.bf16.msra.mxu0 %v140
    %168 = vmatprep.subr.bf16.mxu0 0
    %169 = vmatpush2.bf16.msra.mxu0 0
    %170 = vmatprep.subr.bf16.mxu0 0
    %171 = vmatpush2.bf16.msra.mxu0 0
    %172 = vmatprep.subr.bf16.mxu0 0
    %173 = vmatpush2.bf16.msra.mxu0 0
    %174 = vmatprep.subr.bf16.mxu0 0
    %175 = vmatpush2.bf16.msra.mxu0 0
    %176 = vmatprep.subr.bf16.mxu0 0
    %177 = vmatpush2.bf16.msra.mxu0 0
    %178 = vmatprep.subr.bf16.mxu0 0
    %179 = vmatpush2.bf16.msra.mxu0 0
    %180 = vmatprep.subr.bf16.mxu0 0
    %181 = vmatpush2.bf16.msra.mxu0 0
    %182 = vmatprep.subr.bf16.mxu0 0
    %183 = vmatpush2.bf16.msra.mxu0 0
    %184 = vmatprep.mubr.bf16.mxu0 0
    %185 = vmatmul.mubr.bf16.gmra.mxu0 %v150
    %v186 = vpop.f32.mrf.mxu0
    %v187 = vadd.f32 %v122, %v186
    %v188 = vpop.f32.mrf.mxu0
    %v189 = vpop.f32.mrf.mxu0
    %v190 = vadd.f32 %v122, %v189
    %v191 = vpop.f32.mrf.mxu0
    %192 = vdwg.mxu0
    %v193 = vld [vmem:[%s1] sm:$0xff]
    %v194 = vld [vmem:[%s1 + $0x8] sm:$0xff]
    %v195 = vadd.f32 %v187, %v193
    %v196 = vadd.f32 %v190, %v194
    %v197 = vsel %vm61, %v195, 0.0
    %198 = vadd.xlane.f32.xlu0 %v197
    %v199 = vpop.xlane.xlu0 %198
    %v200 = vsel %vm61, %v196, 0.0
    %201 = vadd.xlane.f32.xlu0 %v200
    %v202 = vpop.xlane.xlu0 %201
    %v203 = vrcp.pop 32.0
    %v204 = vmul.f32 %v199, %v203
    %v205 = vmul.f32 %v202, %v203
    %v206 = vsub.f32 %v195, %v204
    %v207 = vsub.f32 %v196, %v205
    %v208 = vmul.f32 %v206, %v206
    %v209 = vmul.f32 %v207, %v207
    %v210 = vsel %vm61, %v208, 0.0
    %211 = vadd.xlane.f32.xlu0 %v210
    %v212 = vpop.xlane.xlu0 %211
    %v213 = vsel %vm61, %v209, 0.0
    %214 = vadd.xlane.f32.xlu0 %v213
    %v215 = vpop.xlane.xlu0 %214
    %v216 = vmul.f32 %v212, %v203
    %v217 = vmul.f32 %v215, %v203
    %v218 = vadd.f32 %v216, 1e-05
    %v219 = vadd.f32 %v217, 1e-05
    %v220 = vrsqrt.pop %v218
    %v221 = vrsqrt.pop %v219
    %v222 = vmul.f32 %v206, %v220
    %v223 = vmul.f32 %v207, %v221
    %v224 = vld [vmem:[%s6] sm:$0x1]
    %v226 = vlaneseq
    %v227 = vshrl.u32 %v226, 7
    %v228 = vsub.s32 0, %v227
    %v229 = vrot.slane %v224, %v228
    %v231 = vmul.f32 %v222, %v229
    %v232 = vmul.f32 %v223, %v229
    %v233 = vld [vmem:[%s7] sm:$0x1]
    %v235 = vlaneseq
    %v236 = vshrl.u32 %v235, 7
    %v237 = vsub.s32 0, %v236
    %v238 = vrot.slane %v233, %v237
    %v240 = vadd.f32 %v231, %v238
    %v241 = vadd.f32 %v232, %v238
    %242 = vst.msk [vmem:[#allocation2] sm:$0xff] %vm61, %v240
    %243 = vst.msk [vmem:[#allocation2 + $0x8] sm:$0xff] %vm61, %v241
    // Predicated region
    $region34: #{base_cross_attention_forward.5} parent=1 // pred_check
      _
    $region35: #{base_cross_attention_forward.5} parent=1 // pred_check_branch
      %245 = sbr.rel (0) target = $region37
    $region36: #{base_cross_attention_forward.5} parent=1 // pred_region
      %s247 = ssub.s32 256, 256
      %248 = vsyncadd [#allocation3], %s247
      %s249 = sshll.u32 [#allocation2], 4
      %s250 = int_to_ptr.vmem [resolvable:$true] %s249
      %255 = dma.vmem_to_hbm [thread:$0]  %s250, 256, %s8, [#allocation3], 128, 128, 8
    $region37: #{base_cross_attention_forward.5} parent=1 // pred_fallthru
      _
    // Predicated region
    $region38: #{base_cross_attention_forward.5} parent=1 // pred_check
      _
    $region39: #{base_cross_attention_forward.5} parent=1 // pred_check_branch
      %257 = sbr.rel (0) target = $region41
    $region40: #{base_cross_attention_forward.5} parent=1 // pred_region
      %258 = dma.done [#allocation3], 256
    $region41: #{base_cross_attention_forward.5} parent=1 // pred_fallthru
      _
    %259 = vsyncpa [#allocation3], 1

// kernel: base_cross_attention_forward.3
$region0: #{base_cross_attention_forward.3}
  #allocation0 [shape = 'u32[]', space=smem, size = 0x4, offset = 0x4, fixed_abs, tag = 'smem constant byte address 0x4 - core index']
  #allocation1 [shape = 'u32[144,128]{1,0:T(1,128)}', space=vmem, size = 0x12000, scoped, tag = 'internal scratch']
  %s0 = inlined_call_operand.vmem [shape: f32[16,32], index: 0, kind: input, shape index: {}]
  %s1 = inlined_call_operand.vmem [shape: f32[16,32], index: 1, kind: input, shape index: {}]
  %s2 = inlined_call_operand.vmem [shape: f32[16,32], index: 2, kind: input, shape index: {}]
  %s3 = inlined_call_operand.vmem [shape: bf16[3,32,32], index: 3, kind: input, shape index: {}]
  %s4 = inlined_call_operand.vmem [shape: f32[3,1,32], index: 4, kind: input, shape index: {}]
  %s5 = inlined_call_operand.vmem [shape: bf16[16,32], index: 5, kind: output, shape index: {0}]
  %s6 = inlined_call_operand.vmem [shape: bf16[16,32], index: 6, kind: output, shape index: {1}]
  %s7 = inlined_call_operand.vmem [shape: bf16[16,32], index: 7, kind: output, shape index: {2}]
  %8 = xla_tuple %s5, %s6, %s7
  %s9 = sld [smem:[#allocation0]]
  $region46: #{base_cross_attention_forward.3} parent=0
    _
  %s11 = ssub.s32 1, %s9
  %s12 = scalar_select 0, %s11, %s9
  // Predicated region
  $region2: #{base_cross_attention_forward.3} parent=0 // pred_check
    _
  $region3: #{base_cross_attention_forward.3} parent=0 // pred_check_branch
    %14 = sbr.rel (0) target = $region5
  $region4: #{base_cross_attention_forward.3} parent=0 // pred_region
    _
  $region5: #{base_cross_attention_forward.3} parent=0 // pred_fallthru
    _
  // Predicated region
  $region6: #{base_cross_attention_forward.3} parent=0 // pred_check
    _
  $region7: #{base_cross_attention_forward.3} parent=0 // pred_check_branch
    %16 = sbr.rel (0) target = $region9
  $region8: #{base_cross_attention_forward.3} parent=0 // pred_region
    _
  $region9: #{base_cross_attention_forward.3} parent=0 // pred_fallthru
    _
  // Predicated region
  $region10: #{base_cross_attention_forward.3} parent=0 // pred_check
    _
  $region11: #{base_cross_attention_forward.3} parent=0 // pred_check_branch
    %18 = sbr.rel (0) target = $region13
  $region12: #{base_cross_attention_forward.3} parent=0 // pred_region
    _
  $region13: #{base_cross_attention_forward.3} parent=0 // pred_fallthru
    _
  // Predicated region
  $region14: #{base_cross_attention_forward.3} parent=0 // pred_check
    _
  $region15: #{base_cross_attention_forward.3} parent=0 // pred_check_branch
    %20 = sbr.rel (0) target = $region17
  $region16: #{base_cross_attention_forward.3} parent=0 // pred_region
    _
  $region17: #{base_cross_attention_forward.3} parent=0 // pred_fallthru
    _
  // Predicated region
  $region18: #{base_cross_attention_forward.3} parent=0 // pred_check
    _
  $region19: #{base_cross_attention_forward.3} parent=0 // pred_check_branch
    %22 = sbr.rel (0) target = $region21
  $region20: #{base_cross_attention_forward.3} parent=0 // pred_region
    _
  $region21: #{base_cross_attention_forward.3} parent=0 // pred_fallthru
    _
  %v24 = vld [vmem:[%s0] sm:$0xff]
  %v25 = vld [vmem:[%s0 + $0x8] sm:$0xff]
  %v26 = vpack.c.bf16 %v25, %v24
  %v27 = vld [vmem:[%s3] sm:$0xf]
  %v28 = vld [vmem:[%s3 + $0x4] sm:$0xf]
  %v29 = vld [vmem:[%s3 + $0x8] sm:$0xf]
  %v30 = vld [vmem:[%s3 + $0xc] sm:$0xf]
  %v31 = vld [vmem:[%s4] sm:$0x1]
  %v33 = vlaneseq
  %v34 = vshrl.u32 %v33, 7
  %v35 = vsub.s32 0, %v34
  %v36 = vrot.slane %v31, %v35
  %v42 = vunpack.c.l.b16 %v27
  %v43 = vunpack.c.l.b16 %v28
  %v44 = vunpack.c.l.b16 %v29
  %v45 = vunpack.c.l.b16 %v30
  %v46 = vpack.c.b16 %v43, %v42
  %v47 = vpack.c.b16 %v45, %v44
  %vm50 = vcmask 261120
  %v52 = vsel %vm50, %v26, 0
  %54 = vmatprep.subr.bf16.mxu0 0
  %55 = vmatpush1.bf16.msra.mxu0 0
  %56 = vmatprep.subr.bf16.mxu0 0
  %57 = vmatpush1.bf16.msra.mxu0 0
  %58 = vmatprep.subr.bf16.mxu0 0
  %59 = vmatpush1.bf16.msra.mxu0 0
  %60 = vmatprep.subr.bf16.mxu0 0
  %61 = vmatpush1.bf16.msra.mxu0 0
  %62 = vmatprep.subr.bf16.mxu0 0
  %63 = vmatpush1.bf16.msra.mxu0 0
  %64 = vmatprep.subr.bf16.mxu0 0
  %65 = vmatpush1.bf16.msra.mxu0 0
  %66 = vmatprep.subr.bf16.mxu0 0
  %67 = vmatpush1.bf16.msra.mxu0 %v47
  %68 = vmatprep.subr.bf16.mxu0 0
  %69 = vmatpush1.bf16.msra.mxu0 %v46
  %70 = vmatprep.subr.bf16.mxu0 0
  %71 = vmatpush2.bf16.msra.mxu0 0
  %72 = vmatprep.subr.bf16.mxu0 0
  %73 = vmatpush2.bf16.msra.mxu0 0
  %74 = vmatprep.subr.bf16.mxu0 0
  %75 = vmatpush2.bf16.msra.mxu0 0
  %76 = vmatprep.subr.bf16.mxu0 0
  %77 = vmatpush2.bf16.msra.mxu0 0
  %78 = vmatprep.subr.bf16.mxu0 0
  %79 = vmatpush2.bf16.msra.mxu0 0
  %80 = vmatprep.subr.bf16.mxu0 0
  %81 = vmatpush2.bf16.msra.mxu0 0
  %82 = vmatprep.subr.bf16.mxu0 0
  %83 = vmatpush2.bf16.msra.mxu0 0
  %84 = vmatprep.subr.bf16.mxu0 0
  %85 = vmatpush2.bf16.msra.mxu0 0
  %86 = vmatprep.mubr.bf16.mxu0 0
  %87 = vmatmul.mubr.bf16.gmra.mxu0 %v52
  %v88 = vpop.f32.mrf.mxu0
  %v89 = vadd.f32 %v36, %v88
  %v90 = vpop.f32.mrf.mxu0
  %v91 = vpop.f32.mrf.mxu0
  %v92 = vadd.f32 %v36, %v91
  %v93 = vpop.f32.mrf.mxu0
  %94 = vdwg.mxu0
  %v95 = vpack.c.bf16 %v92, %v89
  %v97 = vunpack.c.l.b16 %v95
  %v98 = vunpack.c.h.b16 %v95
  %v99 = vpack.c.b16 %v97, %v97
  %v100 = vpack.c.b16 %v98, %v98
  %vm103 = vcmask 257024
  %104 = vst.msk [vmem:[%s5] sm:$0xf] %vm103, %v99
  %105 = vst.msk [vmem:[%s5 + $0x4] sm:$0xf] %vm103, %v100
  %v106 = vld [vmem:[%s1] sm:$0xff]
  %v107 = vld [vmem:[%s1 + $0x8] sm:$0xff]
  %v108 = vpack.c.bf16 %v107, %v106
  %s109 = scalar_lea.vmem %s3, 16
  %v110 = vld [vmem:[%s109] sm:$0xf]
  %v111 = vld [vmem:[%s109 + $0x4] sm:$0xf]
  %v112 = vld [vmem:[%s109 + $0x8] sm:$0xf]
  %v113 = vld [vmem:[%s109 + $0xc] sm:$0xf]
  %s114 = scalar_lea.vmem %s4, 1
  %v115 = vld [vmem:[%s114] sm:$0x1]
  %v117 = vlaneseq
  %v118 = vshrl.u32 %v117, 7
  %v119 = vsub.s32 0, %v118
  %v120 = vrot.slane %v115, %v119
  %v126 = vunpack.c.l.b16 %v110
  %v127 = vunpack.c.l.b16 %v111
  %v128 = vunpack.c.l.b16 %v112
  %v129 = vunpack.c.l.b16 %v113
  %v130 = vpack.c.b16 %v127, %v126
  %v131 = vpack.c.b16 %v129, %v128
  %v135 = vsel %vm50, %v108, 0
  %137 = vmatprep.subr.bf16.mxu0 0
  %138 = vmatpush1.bf16.msra.mxu0 0
  %139 = vmatprep.subr.bf16.mxu0 0
  %140 = vmatpush1.bf16.msra.mxu0 0
  %141 = vmatprep.subr.bf16.mxu0 0
  %142 = vmatpush1.bf16.msra.mxu0 0
  %143 = vmatprep.subr.bf16.mxu0 0
  %144 = vmatpush1.bf16.msra.mxu0 0
  %145 = vmatprep.subr.bf16.mxu0 0
  %146 = vmatpush1.bf16.msra.mxu0 0
  %147 = vmatprep.subr.bf16.mxu0 0
  %148 = vmatpush1.bf16.msra.mxu0 0
  %149 = vmatprep.subr.bf16.mxu0 0
  %150 = vmatpush1.bf16.msra.mxu0 %v131
  %151 = vmatprep.subr.bf16.mxu0 0
  %152 = vmatpush1.bf16.msra.mxu0 %v130
  %153 = vmatprep.subr.bf16.mxu0 0
  %154 = vmatpush2.bf16.msra.mxu0 0
  %155 = vmatprep.subr.bf16.mxu0 0
  %156 = vmatpush2.bf16.msra.mxu0 0
  %157 = vmatprep.subr.bf16.mxu0 0
  %158 = vmatpush2.bf16.msra.mxu0 0
  %159 = vmatprep.subr.bf16.mxu0 0
  %160 = vmatpush2.bf16.msra.mxu0 0
  %161 = vmatprep.subr.bf16.mxu0 0
  %162 = vmatpush2.bf16.msra.mxu0 0
  %163 = vmatprep.subr.bf16.mxu0 0
  %164 = vmatpush2.bf16.msra.mxu0 0
  %165 = vmatprep.subr.bf16.mxu0 0
  %166 = vmatpush2.bf16.msra.mxu0 0
  %167 = vmatprep.subr.bf16.mxu0 0
  %168 = vmatpush2.bf16.msra.mxu0 0
  %169 = vmatprep.mubr.bf16.mxu0 0
  %170 = vmatmul.mubr.bf16.gmra.mxu0 %v135
  %v171 = vpop.f32.mrf.mxu0
  %v172 = vadd.f32 %v120, %v171
  %v173 = vpop.f32.mrf.mxu0
  %v174 = vpop.f32.mrf.mxu0
  %v175 = vadd.f32 %v120, %v174
  %v176 = vpop.f32.mrf.mxu0
  %177 = vdwg.mxu0
  %v178 = vpack.c.bf16 %v175, %v172
  %v180 = vunpack.c.l.b16 %v178
  %v181 = vunpack.c.h.b16 %v178
  %v182 = vpack.c.b16 %v180, %v180
  %v183 = vpack.c.b16 %v181, %v181
  %186 = vst.msk [vmem:[%s6] sm:$0xf] %vm103, %v182
  %187 = vst.msk [vmem:[%s6 + $0x4] sm:$0xf] %vm103, %v183
  %v188 = vld [vmem:[%s2] sm:$0xff]
  %v189 = vld [vmem:[%s2 + $0x8] sm:$0xff]
  %v190 = vpack.c.bf16 %v189, %v188
  %s191 = scalar_lea.vmem %s3, 32
  %v192 = vld [vmem:[%s191] sm:$0xf]
  %v193 = vld [vmem:[%s191 + $0x4] sm:$0xf]
  %v194 = vld [vmem:[%s191 + $0x8] sm:$0xf]
  %v195 = vld [vmem:[%s191 + $0xc] sm:$0xf]
  %s196 = scalar_lea.vmem %s4, 2
  %v197 = vld [vmem:[%s196] sm:$0x1]
  %v199 = vlaneseq
  %v200 = vshrl.u32 %v199, 7
  %v201 = vsub.s32 0, %v200
  %v202 = vrot.slane %v197, %v201
  %v208 = vunpack.c.l.b16 %v192
  %v209 = vunpack.c.l.b16 %v193
  %v210 = vunpack.c.l.b16 %v194
  %v211 = vunpack.c.l.b16 %v195
  %v212 = vpack.c.b16 %v209, %v208
  %v213 = vpack.c.b16 %v211, %v210
  %v217 = vsel %vm50, %v190, 0
  %219 = vmatprep.subr.bf16.mxu0 0
  %220 = vmatpush1.bf16.msra.mxu0 0
  %221 = vmatprep.subr.bf16.mxu0 0
  %222 = vmatpush1.bf16.msra.mxu0 0
  %223 = vmatprep.subr.bf16.mxu0 0
  %224 = vmatpush1.bf16.msra.mxu0 0
  %225 = vmatprep.subr.bf16.mxu0 0
  %226 = vmatpush1.bf16.msra.mxu0 0
  %227 = vmatprep.subr.bf16.mxu0 0
  %228 = vmatpush1.bf16.msra.mxu0 0
  %229 = vmatprep.subr.bf16.mxu0 0
  %230 = vmatpush1.bf16.msra.mxu0 0
  %231 = vmatprep.subr.bf16.mxu0 0
  %232 = vmatpush1.bf16.msra.mxu0 %v213
  %233 = vmatprep.subr.bf16.mxu0 0
  %234 = vmatpush1.bf16.msra.mxu0 %v212
  %235 = vmatprep.subr.bf16.mxu0 0
  %236 = vmatpush2.bf16.msra.mxu0 0
  %237 = vmatprep.subr.bf16.mxu0 0
  %238 = vmatpush2.bf16.msra.mxu0 0
  %239 = vmatprep.subr.bf16.mxu0 0
  %240 = vmatpush2.bf16.msra.mxu0 0
  %241 = vmatprep.subr.bf16.mxu0 0
  %242 = vmatpush2.bf16.msra.mxu0 0
  %243 = vmatprep.subr.bf16.mxu0 0
  %244 = vmatpush2.bf16.msra.mxu0 0
  %245 = vmatprep.subr.bf16.mxu0 0
  %246 = vmatpush2.bf16.msra.mxu0 0
  %247 = vmatprep.subr.bf16.mxu0 0
  %248 = vmatpush2.bf16.msra.mxu0 0
  %249 = vmatprep.subr.bf16.mxu0 0
  %250 = vmatpush2.bf16.msra.mxu0 0
  %251 = vmatprep.mubr.bf16.mxu0 0
  %252 = vmatmul.mubr.bf16.gmra.mxu0 %v217
  %v253 = vpop.f32.mrf.mxu0
  %v254 = vadd.f32 %v202, %v253
  %v255 = vpop.f32.mrf.mxu0
  %v256 = vpop.f32.mrf.mxu0
  %v257 = vadd.f32 %v202, %v256
  %v258 = vpop.f32.mrf.mxu0
  %259 = vdwg.mxu0
  %v260 = vpack.c.bf16 %v257, %v254
  %v262 = vunpack.c.l.b16 %v260
  %v263 = vunpack.c.h.b16 %v260
  %v264 = vpack.c.b16 %v262, %v262
  %v265 = vpack.c.b16 %v263, %v263
  %268 = vst.msk [vmem:[%s7] sm:$0xf] %vm103, %v264
  %269 = vst.msk [vmem:[%s7 + $0x4] sm:$0xf] %vm103, %v265
  // Predicated region
  $region22: #{base_cross_attention_forward.3} parent=0 // pred_check
    _
  $region23: #{base_cross_attention_forward.3} parent=0 // pred_check_branch
    %271 = sbr.rel (0) target = $region25
  $region24: #{base_cross_attention_forward.3} parent=0 // pred_region
    _
  $region25: #{base_cross_attention_forward.3} parent=0 // pred_fallthru
    _
  // Predicated region
  $region26: #{base_cross_attention_forward.3} parent=0 // pred_check
    _
  $region27: #{base_cross_attention_forward.3} parent=0 // pred_check_branch
    %273 = sbr.rel (0) target = $region29
  $region28: #{base_cross_attention_forward.3} parent=0 // pred_region
    _
  $region29: #{base_cross_attention_forward.3} parent=0 // pred_fallthru
    _
  // Predicated region
  $region30: #{base_cross_attention_forward.3} parent=0 // pred_check
    _
  $region31: #{base_cross_attention_forward.3} parent=0 // pred_check_branch
    %275 = sbr.rel (0) target = $region33
  $region32: #{base_cross_attention_forward.3} parent=0 // pred_region
    _
  $region33: #{base_cross_attention_forward.3} parent=0 // pred_fallthru
    _
  // Predicated region
  $region34: #{base_cross_attention_forward.3} parent=0 // pred_check
    _
  $region35: #{base_cross_attention_forward.3} parent=0 // pred_check_branch
    %277 = sbr.rel (0) target = $region37
  $region36: #{base_cross_attention_forward.3} parent=0 // pred_region
    _
  $region37: #{base_cross_attention_forward.3} parent=0 // pred_fallthru
    _
  // Predicated region
  $region38: #{base_cross_attention_forward.3} parent=0 // pred_check
    _
  $region39: #{base_cross_attention_forward.3} parent=0 // pred_check_branch
    %279 = sbr.rel (0) target = $region41
  $region40: #{base_cross_attention_forward.3} parent=0 // pred_region
    _
  $region41: #{base_cross_attention_forward.3} parent=0 // pred_fallthru
    _
  // Predicated region
  $region42: #{base_cross_attention_forward.3} parent=0 // pred_check
    _
  $region43: #{base_cross_attention_forward.3} parent=0 // pred_check_branch
    %281 = sbr.rel (0) target = $region45
  $region44: #{base_cross_attention_forward.3} parent=0 // pred_region
    _
  $region45: #{base_cross_attention_forward.3} parent=0 // pred_fallthru
    _

// kernel: base_cross_attention_forward.4
$region0: #{base_cross_attention_forward.4}
  #allocation0 [shape = 'u32[]', space=smem, size = 0x4, offset = 0x4, fixed_abs, tag = 'smem constant byte address 0x4 - core index']
  #allocation1 [shape = 'u32[144,128]{1,0:T(1,128)}', space=vmem, size = 0x12000, scoped, tag = 'internal scratch']
  #allocation2 [shape = 'bf16[8,32]{1,0:T(8,128)(2,1)}', space=vmem, size = 0x800, scoped, tag = 'scratch operand']
  %s0 = inlined_call_operand.vmem [shape: bf16[2,8,32], index: 0, kind: input, shape index: {}]
  %s1 = inlined_call_operand.vmem [shape: bf16[2,8,32], index: 1, kind: input, shape index: {}]
  %s2 = inlined_call_operand.vmem [shape: bf16[2,8,32], index: 2, kind: input, shape index: {}]
  %s3 = inlined_call_operand.vmem [shape: bf16[32,32], index: 3, kind: input, shape index: {}]
  %s4 = inlined_call_operand.vmem [shape: f32[1,32], index: 4, kind: input, shape index: {}]
  %s5 = inlined_call_operand.vmem [shape: bf16[2,8,32], index: 5, kind: output, shape index: {}]
  %s6 = sld [smem:[#allocation0]]
  $region53: #{base_cross_attention_forward.4} parent=0
    _
  %s8 = ssub.s32 1, %s6
  %s9 = scalar_select 0, %s8, %s6
  loop: start=0, step=1, limit=4
  $region2: #{base_cross_attention_forward.4} parent=0 // loop_pre_header
    _
  $region3: #{base_cross_attention_forward.4} parent=0 // loop_header
    %s11 = sphi 0, %s15
    %p12 = scmp.ge.s32.totalorder %s11, 4
    %s21 = sphi 0, %s23
    %s24 = sphi 0, %s21
    %s25 = sphi 0, %s24
    %s41 = sphi 0, %s25
    %s47 = sphi 0, %s49
    %s50 = sphi 0, %s47
    %s51 = sphi 0, %s50
    %s67 = sphi 0, %s51
    %s73 = sphi 0, %s75
    %s76 = sphi 0, %s73
    %s77 = sphi 0, %s76
    %s93 = sphi 0, %s77
    %s97 = sphi 0, %s97
    %s99 = sphi 0, %s97
    %s100 = sphi 0, %s99
    %s114 = sphi 0, %s100
    %s118 = sphi 0, %s118
    %s120 = sphi 0, %s118
    %s121 = sphi 0, %s120
    %s135 = sphi 0, %s121
    %s141 = sphi 0, %s143
    %s144 = sphi 0, %s141
    %s145 = sphi 0, %s144
    %s161 = sphi 0, %s145
  $region4: #{base_cross_attention_forward.4} parent=0 // loop_header_branch
    %14 = sbr.rel (%p12) target = $region8
  $region5: #{base_cross_attention_forward.4} parent=0 // loop_body
    %s16 = ssub.s32 %s11, 1
    %s17 = ssub.s32 %s11, 2
    %s18 = sadd.s32 %s11, 1
    %s19 = ssub.s32 %s11, %s18
    %p20 = scmp.eq.s32.totalorder %s19, 0
    %s22 = sadd.s32 %s21, 1
    %s23 = scalar_select %p20, %s21, %s22
    %p26 = pneg %p20
    %p27 = scmp.eq.s32.totalorder %s11, 1
    %p28 = por %p26, %p27
    %p29 = scmp.ne.s32.totalorder %s21, %s24
    %p30 = scmp.eq.s32.totalorder %s11, 0
    %p31 = por %p29, %p30
    %p32 = scmp.ne.s32.totalorder %s21, %s24
    %p33 = scmp.eq.s32.totalorder %s16, 1
    %p34 = por %p32, %p33
    %p35 = scmp.ne.s32.totalorder %s24, %s25
    %p36 = scmp.eq.s32.totalorder %s16, 0
    %p37 = por %p35, %p36
    %p38 = scmp.ne.s32.totalorder %s24, %s25
    %p39 = scmp.eq.s32.totalorder %s17, 1
    %p40 = por %p38, %p39
    %p42 = scmp.ne.s32.totalorder %s25, %s41
    %p43 = scmp.eq.s32.totalorder %s17, 0
    %p44 = por %p42, %p43
    %s45 = ssub.s32 %s11, %s18
    %p46 = scmp.eq.s32.totalorder %s45, 0
    %s48 = sadd.s32 %s47, 1
    %s49 = scalar_select %p46, %s47, %s48
    %p52 = pneg %p46
    %p53 = scmp.eq.s32.totalorder %s11, 1
    %p54 = por %p52, %p53
    %p55 = scmp.ne.s32.totalorder %s47, %s50
    %p56 = scmp.eq.s32.totalorder %s11, 0
    %p57 = por %p55, %p56
    %p58 = scmp.ne.s32.totalorder %s47, %s50
    %p59 = scmp.eq.s32.totalorder %s16, 1
    %p60 = por %p58, %p59
    %p61 = scmp.ne.s32.totalorder %s50, %s51
    %p62 = scmp.eq.s32.totalorder %s16, 0
    %p63 = por %p61, %p62
    %p64 = scmp.ne.s32.totalorder %s50, %s51
    %p65 = scmp.eq.s32.totalorder %s17, 1
    %p66 = por %p64, %p65
    %p68 = scmp.ne.s32.totalorder %s51, %s67
    %p69 = scmp.eq.s32.totalorder %s17, 0
    %p70 = por %p68, %p69
    %s71 = ssub.s32 %s11, %s18
    %p72 = scmp.eq.s32.totalorder %s71, 0
    %s74 = sadd.s32 %s73, 1
    %s75 = scalar_select %p72, %s73, %s74
    %p78 = pneg %p72
    %p79 = scmp.eq.s32.totalorder %s11, 1
    %p80 = por %p78, %p79
    %p81 = scmp.ne.s32.totalorder %s73, %s76
    %p82 = scmp.eq.s32.totalorder %s11, 0
    %p83 = por %p81, %p82
    %p84 = scmp.ne.s32.totalorder %s73, %s76
    %p85 = scmp.eq.s32.totalorder %s16, 1
    %p86 = por %p84, %p85
    %p87 = scmp.ne.s32.totalorder %s76, %s77
    %p88 = scmp.eq.s32.totalorder %s16, 0
    %p89 = por %p87, %p88
    %p90 = scmp.ne.s32.totalorder %s76, %s77
    %p91 = scmp.eq.s32.totalorder %s17, 1
    %p92 = por %p90, %p91
    %p94 = scmp.ne.s32.totalorder %s77, %s93
    %p95 = scmp.eq.s32.totalorder %s17, 0
    %p96 = por %p94, %p95
    %s98 = sadd.s32 %s97, 1
    %p101 = scmp.eq.s32.totalorder %s11, 1
    %p102 = scmp.ne.s32.totalorder %s97, %s99
    %p103 = scmp.eq.s32.totalorder %s11, 0
    %p104 = por %p102, %p103
    %p105 = scmp.ne.s32.totalorder %s97, %s99
    %p106 = scmp.eq.s32.totalorder %s16, 1
    %p107 = por %p105, %p106
    %p108 = scmp.ne.s32.totalorder %s99, %s100
    %p109 = scmp.eq.s32.totalorder %s16, 0
    %p110 = por %p108, %p109
    %p111 = scmp.ne.s32.totalorder %s99, %s100
    %p112 = scmp.eq.s32.totalorder %s17, 1
    %p113 = por %p111, %p112
    %p115 = scmp.ne.s32.totalorder %s100, %s114
    %p116 = scmp.eq.s32.totalorder %s17, 0
    %p117 = por %p115, %p116
    %s119 = sadd.s32 %s118, 1
    %p122 = scmp.eq.s32.totalorder %s11, 1
    %p123 = scmp.ne.s32.totalorder %s118, %s120
    %p124 = scmp.eq.s32.totalorder %s11, 0
    %p125 = por %p123, %p124
    %p126 = scmp.ne.s32.totalorder %s118, %s120
    %p127 = scmp.eq.s32.totalorder %s16, 1
    %p128 = por %p126, %p127
    %p129 = scmp.ne.s32.totalorder %s120, %s121
    %p130 = scmp.eq.s32.totalorder %s16, 0
    %p131 = por %p129, %p130
    %p132 = scmp.ne.s32.totalorder %s120, %s121
    %p133 = scmp.eq.s32.totalorder %s17, 1
    %p134 = por %p132, %p133
    %p136 = scmp.ne.s32.totalorder %s121, %s135
    %p137 = scmp.eq.s32.totalorder %s17, 0
    %p138 = por %p136, %p137
    %s139 = ssub.s32 %s11, %s18
    %p140 = scmp.eq.s32.totalorder %s139, 0
    %s142 = sadd.s32 %s141, 1
    %s143 = scalar_select %p140, %s141, %s142
    %p146 = pneg %p140
    %p147 = scmp.eq.s32.totalorder %s11, 1
    %p148 = por %p146, %p147
    %p149 = scmp.ne.s32.totalorder %s141, %s144
    %p150 = scmp.eq.s32.totalorder %s11, 0
    %p151 = por %p149, %p150
    %p152 = scmp.ne.s32.totalorder %s141, %s144
    %p153 = scmp.eq.s32.totalorder %s16, 1
    %p154 = por %p152, %p153
    %p155 = scmp.ne.s32.totalorder %s144, %s145
    %p156 = scmp.eq.s32.totalorder %s16, 0
    %p157 = por %p155, %p156
    %p158 = scmp.ne.s32.totalorder %s144, %s145
    %p159 = scmp.eq.s32.totalorder %s17, 1
    %p160 = por %p158, %p159
    %p162 = scmp.ne.s32.totalorder %s145, %s161
    %p163 = scmp.eq.s32.totalorder %s17, 0
    %p164 = por %p162, %p163
    %p165 = scmp.le.s32.totalorder 1, %s11
    %p166 = scmp.lt.s32.totalorder %s11, 3
    %p167 = pnand %p165, %p166
    %p168 = pneg %p167
    // Predicated region
    $region9: #{base_cross_attention_forward.4} parent=5 // pred_check
      _
    $region10: #{base_cross_attention_forward.4} parent=5 // pred_check_branch
      %170 = sbr.rel (%p167) target = $region12
    $region11: #{base_cross_attention_forward.4} parent=5 // pred_region
      %s171 = ssub.s32 %s11, 1
      // Predicated region
      $region13: #{base_cross_attention_forward.4} parent=11 // pred_check
        %p172 = pneg %p110
      $region14: #{base_cross_attention_forward.4} parent=11 // pred_check_branch
        %174 = sbr.rel (%p172) target = $region16
      $region15: #{base_cross_attention_forward.4} parent=11 // pred_region
        _
      $region16: #{base_cross_attention_forward.4} parent=11 // pred_fallthru
        _
      // Predicated region
      $region17: #{base_cross_attention_forward.4} parent=11 // pred_check
        %p175 = pneg %p131
      $region18: #{base_cross_attention_forward.4} parent=11 // pred_check_branch
        %177 = sbr.rel (%p175) target = $region20
      $region19: #{base_cross_attention_forward.4} parent=11 // pred_region
        _
      $region20: #{base_cross_attention_forward.4} parent=11 // pred_fallthru
        _
    $region12: #{base_cross_attention_forward.4} parent=5 // pred_fallthru
      _
    %p178 = scmp.lt.s32.totalorder %s11, 2
    // Predicated region
    $region21: #{base_cross_attention_forward.4} parent=5 // pred_check
      %p179 = pneg %p178
    $region22: #{base_cross_attention_forward.4} parent=5 // pred_check_branch
      %181 = sbr.rel (%p179) target = $region24
    $region23: #{base_cross_attention_forward.4} parent=5 // pred_region
      // Predicated region
      $region25: #{base_cross_attention_forward.4} parent=23 // pred_check
        %p182 = pneg %p31
      $region26: #{base_cross_attention_forward.4} parent=23 // pred_check_branch
        %184 = sbr.rel (%p182) target = $region28
      $region27: #{base_cross_attention_forward.4} parent=23 // pred_region
        %p185 = scmp.lt.s32.totalorder %s11, 1
        %s186 = scalar_select %p185, %s11, 1
        %s187 = smul.addr %s186, 4
        %s188 = scalar_lea.vmem %s0, %s187
      $region28: #{base_cross_attention_forward.4} parent=23 // pred_fallthru
        _
      // Predicated region
      $region29: #{base_cross_attention_forward.4} parent=23 // pred_check
        %p189 = pneg %p57
      $region30: #{base_cross_attention_forward.4} parent=23 // pred_check_branch
        %191 = sbr.rel (%p189) target = $region32
      $region31: #{base_cross_attention_forward.4} parent=23 // pred_region
        %p192 = scmp.lt.s32.totalorder %s11, 1
        %s193 = scalar_select %p192, %s11, 1
        %s194 = smul.addr %s193, 4
        %s195 = scalar_lea.vmem %s1, %s194
      $region32: #{base_cross_attention_forward.4} parent=23 // pred_fallthru
        _
      // Predicated region
      $region33: #{base_cross_attention_forward.4} parent=23 // pred_check
        %p196 = pneg %p83
      $region34: #{base_cross_attention_forward.4} parent=23 // pred_check_branch
        %198 = sbr.rel (%p196) target = $region36
      $region35: #{base_cross_attention_forward.4} parent=23 // pred_region
        %p199 = scmp.lt.s32.totalorder %s11, 1
        %s200 = scalar_select %p199, %s11, 1
        %s201 = smul.addr %s200, 4
        %s202 = scalar_lea.vmem %s2, %s201
      $region36: #{base_cross_attention_forward.4} parent=23 // pred_fallthru
        _
    $region24: #{base_cross_attention_forward.4} parent=5 // pred_fallthru
      _
    %p203 = scmp.le.s32.totalorder 1, %s11
    %p204 = scmp.lt.s32.totalorder %s11, 3
    %p205 = pnand %p203, %p204
    %p206 = pneg %p205
    // Predicated region
    $region37: #{base_cross_attention_forward.4} parent=5 // pred_check
      _
    $region38: #{base_cross_attention_forward.4} parent=5 // pred_check_branch
      %208 = sbr.rel (%p205) target = $region40
    $region39: #{base_cross_attention_forward.4} parent=5 // pred_region
      %s209 = ssub.s32 %s11, 1
      %p210 = scmp.lt.s32.totalorder %s16, 1
      %s211 = scalar_select %p210, %s16, 1
      %s212 = smul.addr %s211, 4
      %s213 = scalar_lea.vmem %s0, %s212
      %p214 = pneg %p37
      %p215 = pneg %p34
      %p216 = scmp.lt.s32.totalorder %s16, 1
      %s217 = scalar_select %p216, %s16, 1
      %s218 = smul.addr %s217, 4
      %s219 = scalar_lea.vmem %s1, %s218
      %p220 = pneg %p63
      %p221 = pneg %p60
      %p222 = scmp.lt.s32.totalorder %s16, 1
      %s223 = scalar_select %p222, %s16, 1
      %s224 = smul.addr %s223, 4
      %s225 = scalar_lea.vmem %s2, %s224
      %p226 = pneg %p89
      %p227 = pneg %p86
      %p228 = pneg %p110
      %p229 = pneg %p107
      %p230 = pneg %p131
      %p231 = pneg %p128
      %p232 = pneg %p157
      %p233 = pneg %p154
      %p234 = scmp.lt.s32.totalorder %s16, 1
      %s235 = scalar_select %p234, %s16, 1
      %s236 = smul.addr %s235, 4
      %s237 = scalar_lea.vmem %s5, %s236
      %p238 = scmp.lt.s32.totalorder %s16, 1
      %s239 = scalar_select %p238, %s16, 1
      %s240 = smul.addr %s239, 4
      %s241 = scalar_lea.vmem %s0, %s240
      %p242 = scmp.lt.s32.totalorder %s16, 1
      %s243 = scalar_select %p242, %s16, 1
      %s244 = smul.addr %s243, 4
      %s245 = scalar_lea.vmem %s1, %s244
      %p246 = scmp.lt.s32.totalorder %s16, 1
      %s247 = scalar_select %p246, %s16, 1
      %s248 = smul.addr %s247, 4
      %s249 = scalar_lea.vmem %s2, %s248
      %p250 = scmp.lt.s32.totalorder %s16, 1
      %s251 = scalar_select %p250, %s16, 1
      %s252 = smul.addr %s251, 4
      %s253 = scalar_lea.vmem %s5, %s252
      %v255 = vld [vmem:[%s241] sm:$0xf]
      %v256 = vld [vmem:[%s245] sm:$0xf]
      %v257 = vld [vmem:[%s249] sm:$0xf]
      %vm258 = vcmask 64512
      %v260 = vsel %vm258, %v255, 0
      %v263 = vsel %vm258, %v256, 0
      %265 = vmatprep.subr.bf16.mxu0 0
      %266 = vmatpush1.bf16.xpose.msra.mxu0 0
      %267 = vmatprep.subr.bf16.mxu0 0
      %268 = vmatpush1.bf16.xpose.msra.mxu0 0
      %269 = vmatprep.subr.bf16.mxu0 0
      %270 = vmatpush1.bf16.xpose.msra.mxu0 0
      %271 = vmatprep.subr.bf16.mxu0 0
      %272 = vmatpush1.bf16.xpose.msra.mxu0 0
      %273 = vmatprep.subr.bf16.mxu0 0
      %274 = vmatpush1.bf16.xpose.msra.mxu0 0
      %275 = vmatprep.subr.bf16.mxu0 0
      %276 = vmatpush1.bf16.xpose.msra.mxu0 0
      %277 = vmatprep.subr.bf16.mxu0 0
      %278 = vmatpush1.bf16.xpose.msra.mxu0 0
      %279 = vmatprep.subr.bf16.mxu0 0
      %280 = vmatpush1.bf16.xpose.msra.mxu0 %v263
      %281 = vmatprep.subr.bf16.mxu0 0
      %282 = vmatpush2.bf16.xpose.msra.mxu0 0
      %283 = vmatprep.subr.bf16.mxu0 0
      %284 = vmatpush2.bf16.xpose.msra.mxu0 0
      %285 = vmatprep.subr.bf16.mxu0 0
      %286 = vmatpush2.bf16.xpose.msra.mxu0 0
      %287 = vmatprep.subr.bf16.mxu0 0
      %288 = vmatpush2.bf16.xpose.msra.mxu0 0
      %289 = vmatprep.subr.bf16.mxu0 0
      %290 = vmatpush2.bf16.xpose.msra.mxu0 0
      %291 = vmatprep.subr.bf16.mxu0 0
      %292 = vmatpush2.bf16.xpose.msra.mxu0 0
      %293 = vmatprep.subr.bf16.mxu0 0
      %294 = vmatpush2.bf16.xpose.msra.mxu0 0
      %295 = vmatprep.subr.bf16.mxu0 0
      %296 = vmatpush2.bf16.xpose.msra.mxu0 0
      %297 = vmatprep.mubr.bf16.mxu0 0
      %298 = vmatmul.mubr.bf16.gmra.mxu0 %v260
      %v299 = vpop.f32.mrf.mxu0
      %v300 = vadd.f32 0.0, %v299
      %v301 = vpop.f32.mrf.mxu0
      %v302 = vpop.f32.mrf.mxu0
      %v303 = vpop.f32.mrf.mxu0
      %304 = vdwg.mxu0
      %v305 = vsel %vm258, %v300, -inf
      %306 = vmax.xlane.f32.xlu0 %v305
      %v307 = vpop.xlane.xlu0 %306
      %v308 = vsub.f32 %v300, %v307
      %v309 = vmul.f32 %v308, 1.442695
      %v310 = vpow.pop %v309
      %v311 = vsel %vm258, %v310, 0.0
      %312 = vadd.xlane.f32.xlu0 %v311
      %v313 = vpop.xlane.xlu0 %312
      %v314 = vpack.c.bf16 %v310, %v310
      %v316 = vsel %vm258, %v314, 0
      %vm318 = vcmask 1043456
      %v320 = vsel %vm318, %v257, 0
      %322 = vmatprep.subr.bf16.mxu0 0
      %323 = vmatpush1.bf16.msra.mxu0 0
      %324 = vmatprep.subr.bf16.mxu0 0
      %325 = vmatpush1.bf16.msra.mxu0 0
      %326 = vmatprep.subr.bf16.mxu0 0
      %327 = vmatpush1.bf16.msra.mxu0 0
      %328 = vmatprep.subr.bf16.mxu0 0
      %329 = vmatpush1.bf16.msra.mxu0 0
      %330 = vmatprep.subr.bf16.mxu0 0
      %331 = vmatpush1.bf16.msra.mxu0 0
      %332 = vmatprep.subr.bf16.mxu0 0
      %333 = vmatpush1.bf16.msra.mxu0 0
      %334 = vmatprep.subr.bf16.mxu0 0
      %335 = vmatpush1.bf16.msra.mxu0 0
      %336 = vmatprep.subr.bf16.mxu0 0
      %337 = vmatpush1.bf16.msra.mxu0 %v320
      %338 = vmatprep.subr.bf16.mxu0 0
      %339 = vmatpush2.bf16.msra.mxu0 0
      %340 = vmatprep.subr.bf16.mxu0 0
      %341 = vmatpush2.bf16.msra.mxu0 0
      %342 = vmatprep.subr.bf16.mxu0 0
      %343 = vmatpush2.bf16.msra.mxu0 0
      %344 = vmatprep.subr.bf16.mxu0 0
      %345 = vmatpush2.bf16.msra.mxu0 0
      %346 = vmatprep.subr.bf16.mxu0 0
      %347 = vmatpush2.bf16.msra.mxu0 0
      %348 = vmatprep.subr.bf16.mxu0 0
      %349 = vmatpush2.bf16.msra.mxu0 0
      %350 = vmatprep.subr.bf16.mxu0 0
      %351 = vmatpush2.bf16.msra.mxu0 0
      %352 = vmatprep.subr.bf16.mxu0 0
      %353 = vmatpush2.bf16.msra.mxu0 0
      %354 = vmatprep.mubr.bf16.mxu0 0
      %355 = vmatmul.mubr.bf16.gmra.mxu0 %v316
      %v356 = vpop.f32.mrf.mxu0
      %v357 = vadd.f32 0.0, %v356
      %v358 = vpop.f32.mrf.mxu0
      %v359 = vpop.f32.mrf.mxu0
      %v360 = vpop.f32.mrf.mxu0
      %361 = vdwg.mxu0
      %v362 = vrcp.pop %v313
      %v363 = vmul.f32 %v357, %v362
      %v364 = vpack.c.bf16 %v363, %v363
      %vm365 = vcmask 60416
      %366 = vst.msk [vmem:[#allocation2] sm:$0xf] %vm365, %v364
      %v367 = vld [vmem:[%s241] sm:$0xf]
      %v368 = vld [vmem:[%s245] sm:$0xf]
      %v369 = vld [vmem:[%s249] sm:$0xf]
      %v371 = vunpack.c.l.b16 %v367
      %v372 = vpack.c.b16 %v371, %v371
      %373 = vrot.lane.b32.xlu0 %v372, 120
      %v374 = vpop.permute.xlu0 %373
      %v376 = vunpack.c.l.b16 %v368
      %v377 = vpack.c.b16 %v376, %v376
      %378 = vrot.lane.b32.xlu0 %v377, 120
      %v379 = vpop.permute.xlu0 %378
      %v381 = vsel %vm258, %v374, 0
      %v384 = vsel %vm258, %v379, 0
      %386 = vmatprep.subr.bf16.mxu0 0
      %387 = vmatpush1.bf16.xpose.msra.mxu0 0
      %388 = vmatprep.subr.bf16.mxu0 0
      %389 = vmatpush1.bf16.xpose.msra.mxu0 0
      %390 = vmatprep.subr.bf16.mxu0 0
      %391 = vmatpush1.bf16.xpose.msra.mxu0 0
      %392 = vmatprep.subr.bf16.mxu0 0
      %393 = vmatpush1.bf16.xpose.msra.mxu0 0
      %394 = vmatprep.subr.bf16.mxu0 0
      %395 = vmatpush1.bf16.xpose.msra.mxu0 0
      %396 = vmatprep.subr.bf16.mxu0 0
      %397 = vmatpush1.bf16.xpose.msra.mxu0 0
      %398 = vmatprep.subr.bf16.mxu0 0
      %399 = vmatpush1.bf16.xpose.msra.mxu0 0
      %400 = vmatprep.subr.bf16.mxu0 0
      %401 = vmatpush1.bf16.xpose.msra.mxu0 %v384
      %402 = vmatprep.subr.bf16.mxu0 0
      %403 = vmatpush2.bf16.xpose.msra.mxu0 0
      %404 = vmatprep.subr.bf16.mxu0 0
      %405 = vmatpush2.bf16.xpose.msra.mxu0 0
      %406 = vmatprep.subr.bf16.mxu0 0
      %407 = vmatpush2.bf16.xpose.msra.mxu0 0
      %408 = vmatprep.subr.bf16.mxu0 0
      %409 = vmatpush2.bf16.xpose.msra.mxu0 0
      %410 = vmatprep.subr.bf16.mxu0 0
      %411 = vmatpush2.bf16.xpose.msra.mxu0 0
      %412 = vmatprep.subr.bf16.mxu0 0
      %413 = vmatpush2.bf16.xpose.msra.mxu0 0
      %414 = vmatprep.subr.bf16.mxu0 0
      %415 = vmatpush2.bf16.xpose.msra.mxu0 0
      %416 = vmatprep.subr.bf16.mxu0 0
      %417 = vmatpush2.bf16.xpose.msra.mxu0 0
      %418 = vmatprep.mubr.bf16.mxu0 0
      %419 = vmatmul.mubr.bf16.gmra.mxu0 %v381
      %v420 = vpop.f32.mrf.mxu0
      %v421 = vadd.f32 0.0, %v420
      %v422 = vpop.f32.mrf.mxu0
      %v423 = vpop.f32.mrf.mxu0
      %v424 = vpop.f32.mrf.mxu0
      %425 = vdwg.mxu0
      %v426 = vsel %vm258, %v421, -inf
      %427 = vmax.xlane.f32.xlu0 %v426
      %v428 = vpop.xlane.xlu0 %427
      %v429 = vsub.f32 %v421, %v428
      %v430 = vmul.f32 %v429, 1.442695
      %v431 = vpow.pop %v430
      %v432 = vsel %vm258, %v431, 0.0
      %433 = vadd.xlane.f32.xlu0 %v432
      %v434 = vpop.xlane.xlu0 %433
      %v435 = vpack.c.bf16 %v431, %v431
      %v437 = vunpack.c.l.b16 %v369
      %v438 = vpack.c.b16 %v437, %v437
      %439 = vrot.lane.b32.xlu0 %v438, 120
      %v440 = vpop.permute.xlu0 %439
      %v442 = vsel %vm258, %v435, 0
      %v445 = vsel %vm318, %v440, 0
      %447 = vmatprep.subr.bf16.mxu0 0
      %448 = vmatpush1.bf16.msra.mxu0 0
      %449 = vmatprep.subr.bf16.mxu0 0
      %450 = vmatpush1.bf16.msra.mxu0 0
      %451 = vmatprep.subr.bf16.mxu0 0
      %452 = vmatpush1.bf16.msra.mxu0 0
      %453 = vmatprep.subr.bf16.mxu0 0
      %454 = vmatpush1.bf16.msra.mxu0 0
      %455 = vmatprep.subr.bf16.mxu0 0
      %456 = vmatpush1.bf16.msra.mxu0 0
      %457 = vmatprep.subr.bf16.mxu0 0
      %458 = vmatpush1.bf16.msra.mxu0 0
      %459 = vmatprep.subr.bf16.mxu0 0
      %460 = vmatpush1.bf16.msra.mxu0 0
      %461 = vmatprep.subr.bf16.mxu0 0
      %462 = vmatpush1.bf16.msra.mxu0 %v445
      %463 = vmatprep.subr.bf16.mxu0 0
      %464 = vmatpush2.bf16.msra.mxu0 0
      %465 = vmatprep.subr.bf16.mxu0 0
      %466 = vmatpush2.bf16.msra.mxu0 0
      %467 = vmatprep.subr.bf16.mxu0 0
      %468 = vmatpush2.bf16.msra.mxu0 0
      %469 = vmatprep.subr.bf16.mxu0 0
      %470 = vmatpush2.bf16.msra.mxu0 0
      %471 = vmatprep.subr.bf16.mxu0 0
      %472 = vmatpush2.bf16.msra.mxu0 0
      %473 = vmatprep.subr.bf16.mxu0 0
      %474 = vmatpush2.bf16.msra.mxu0 0
      %475 = vmatprep.subr.bf16.mxu0 0
      %476 = vmatpush2.bf16.msra.mxu0 0
      %477 = vmatprep.subr.bf16.mxu0 0
      %478 = vmatpush2.bf16.msra.mxu0 0
      %479 = vmatprep.mubr.bf16.mxu0 0
      %480 = vmatmul.mubr.bf16.gmra.mxu0 %v442
      %v481 = vpop.f32.mrf.mxu0
      %v482 = vadd.f32 0.0, %v481
      %v483 = vpop.f32.mrf.mxu0
      %v484 = vpop.f32.mrf.mxu0
      %v485 = vpop.f32.mrf.mxu0
      %486 = vdwg.mxu0
      %v487 = vrcp.pop %v434
      %v488 = vmul.f32 %v482, %v487
      %v489 = vpack.c.bf16 %v488, %v488
      %v491 = vunpack.c.l.b16 %v489
      %v492 = vpack.c.b16 %v491, %v491
      %493 = vrot.lane.b32.xlu0 %v492, 8
      %v494 = vpop.permute.xlu0 %493
      %vm496 = vcmask 126016
      %497 = vst.msk [vmem:[#allocation2] sm:$0xf] %vm496, %v494
      %v498 = vld [vmem:[%s241] sm:$0xf]
      %v499 = vld [vmem:[%s245] sm:$0xf]
      %v500 = vld [vmem:[%s249] sm:$0xf]
      %v502 = vunpack.c.l.b16 %v498
      %v503 = vpack.c.b16 %v502, %v502
      %504 = vrot.lane.b32.xlu0 %v503, 112
      %v505 = vpop.permute.xlu0 %504
      %v507 = vunpack.c.l.b16 %v499
      %v508 = vpack.c.b16 %v507, %v507
      %509 = vrot.lane.b32.xlu0 %v508, 112
      %v510 = vpop.permute.xlu0 %509
      %v512 = vsel %vm258, %v505, 0
      %v515 = vsel %vm258, %v510, 0
      %517 = vmatprep.subr.bf16.mxu0 0
      %518 = vmatpush1.bf16.xpose.msra.mxu0 0
      %519 = vmatprep.subr.bf16.mxu0 0
      %520 = vmatpush1.bf16.xpose.msra.mxu0 0
      %521 = vmatprep.subr.bf16.mxu0 0
      %522 = vmatpush1.bf16.xpose.msra.mxu0 0
      %523 = vmatprep.subr.bf16.mxu0 0
      %524 = vmatpush1.bf16.xpose.msra.mxu0 0
      %525 = vmatprep.subr.bf16.mxu0 0
      %526 = vmatpush1.bf16.xpose.msra.mxu0 0
      %527 = vmatprep.subr.bf16.mxu0 0
      %528 = vmatpush1.bf16.xpose.msra.mxu0 0
      %529 = vmatprep.subr.bf16.mxu0 0
      %530 = vmatpush1.bf16.xpose.msra.mxu0 0
      %531 = vmatprep.subr.bf16.mxu0 0
      %532 = vmatpush1.bf16.xpose.msra.mxu0 %v515
      %533 = vmatprep.subr.bf16.mxu0 0
      %534 = vmatpush2.bf16.xpose.msra.mxu0 0
      %535 = vmatprep.subr.bf16.mxu0 0
      %536 = vmatpush2.bf16.xpose.msra.mxu0 0
      %537 = vmatprep.subr.bf16.mxu0 0
      %538 = vmatpush2.bf16.xpose.msra.mxu0 0
      %539 = vmatprep.subr.bf16.mxu0 0
      %540 = vmatpush2.bf16.xpose.msra.mxu0 0
      %541 = vmatprep.subr.bf16.mxu0 0
      %542 = vmatpush2.bf16.xpose.msra.mxu0 0
      %543 = vmatprep.subr.bf16.mxu0 0
      %544 = vmatpush2.bf16.xpose.msra.mxu0 0
      %545 = vmatprep.subr.bf16.mxu0 0
      %546 = vmatpush2.bf16.xpose.msra.mxu0 0
      %547 = vmatprep.subr.bf16.mxu0 0
      %548 = vmatpush2.bf16.xpose.msra.mxu0 0
      %549 = vmatprep.mubr.bf16.mxu0 0
      %550 = vmatmul.mubr.bf16.gmra.mxu0 %v512
      %v551 = vpop.f32.mrf.mxu0
      %v552 = vadd.f32 0.0, %v551
      %v553 = vpop.f32.mrf.mxu0
      %v554 = vpop.f32.mrf.mxu0
      %v555 = vpop.f32.mrf.mxu0
      %556 = vdwg.mxu0
      %v557 = vsel %vm258, %v552, -inf
      %558 = vmax.xlane.f32.xlu0 %v557
      %v559 = vpop.xlane.xlu0 %558
      %v560 = vsub.f32 %v552, %v559
      %v561 = vmul.f32 %v560, 1.442695
      %v562 = vpow.pop %v561
      %v563 = vsel %vm258, %v562, 0.0
      %564 = vadd.xlane.f32.xlu0 %v563
      %v565 = vpop.xlane.xlu0 %564
      %v566 = vpack.c.bf16 %v562, %v562
      %v568 = vunpack.c.l.b16 %v500
      %v569 = vpack.c.b16 %v568, %v568
      %570 = vrot.lane.b32.xlu0 %v569, 112
      %v571 = vpop.permute.xlu0 %570
      %v573 = vsel %vm258, %v566, 0
      %v576 = vsel %vm318, %v571, 0
      %578 = vmatprep.subr.bf16.mxu0 0
      %579 = vmatpush1.bf16.msra.mxu0 0
      %580 = vmatprep.subr.bf16.mxu0 0
      %581 = vmatpush1.bf16.msra.mxu0 0
      %582 = vmatprep.subr.bf16.mxu0 0
      %583 = vmatpush1.bf16.msra.mxu0 0
      %584 = vmatprep.subr.bf16.mxu0 0
      %585 = vmatpush1.bf16.msra.mxu0 0
      %586 = vmatprep.subr.bf16.mxu0 0
      %587 = vmatpush1.bf16.msra.mxu0 0
      %588 = vmatprep.subr.bf16.mxu0 0
      %589 = vmatpush1.bf16.msra.mxu0 0
      %590 = vmatprep.subr.bf16.mxu0 0
      %591 = vmatpush1.bf16.msra.mxu0 0
      %592 = vmatprep.subr.bf16.mxu0 0
      %593 = vmatpush1.bf16.msra.mxu0 %v576
      %594 = vmatprep.subr.bf16.mxu0 0
      %595 = vmatpush2.bf16.msra.mxu0 0
      %596 = vmatprep.subr.bf16.mxu0 0
      %597 = vmatpush2.bf16.msra.mxu0 0
      %598 = vmatprep.subr.bf16.mxu0 0
      %599 = vmatpush2.bf16.msra.mxu0 0
      %600 = vmatprep.subr.bf16.mxu0 0
      %601 = vmatpush2.bf16.msra.mxu0 0
      %602 = vmatprep.subr.bf16.mxu0 0
      %603 = vmatpush2.bf16.msra.mxu0 0
      %604 = vmatprep.subr.bf16.mxu0 0
      %605 = vmatpush2.bf16.msra.mxu0 0
      %606 = vmatprep.subr.bf16.mxu0 0
      %607 = vmatpush2.bf16.msra.mxu0 0
      %608 = vmatprep.subr.bf16.mxu0 0
      %609 = vmatpush2.bf16.msra.mxu0 0
      %610 = vmatprep.mubr.bf16.mxu0 0
      %611 = vmatmul.mubr.bf16.gmra.mxu0 %v573
      %v612 = vpop.f32.mrf.mxu0
      %v613 = vadd.f32 0.0, %v612
      %v614 = vpop.f32.mrf.mxu0
      %v615 = vpop.f32.mrf.mxu0
      %v616 = vpop.f32.mrf.mxu0
      %617 = vdwg.mxu0
      %v618 = vrcp.pop %v565
      %v619 = vmul.f32 %v613, %v618
      %v620 = vpack.c.bf16 %v619, %v619
      %v622 = vunpack.c.l.b16 %v620
      %v623 = vpack.c.b16 %v622, %v622
      %624 = vrot.lane.b32.xlu0 %v623, 16
      %v625 = vpop.permute.xlu0 %624
      %vm627 = vcmask 191616
      %628 = vst.msk [vmem:[#allocation2] sm:$0xf] %vm627, %v625
      %v629 = vld [vmem:[%s241] sm:$0xf]
      %v630 = vld [vmem:[%s245] sm:$0xf]
      %v631 = vld [vmem:[%s249] sm:$0xf]
      %v633 = vunpack.c.l.b16 %v629
      %v634 = vpack.c.b16 %v633, %v633
      %635 = vrot.lane.b32.xlu0 %v634, 104
      %v636 = vpop.permute.xlu0 %635
      %v638 = vunpack.c.l.b16 %v630
      %v639 = vpack.c.b16 %v638, %v638
      %640 = vrot.lane.b32.xlu0 %v639, 104
      %v641 = vpop.permute.xlu0 %640
      %v643 = vsel %vm258, %v636, 0
      %v646 = vsel %vm258, %v641, 0
      %648 = vmatprep.subr.bf16.mxu0 0
      %649 = vmatpush1.bf16.xpose.msra.mxu0 0
      %650 = vmatprep.subr.bf16.mxu0 0
      %651 = vmatpush1.bf16.xpose.msra.mxu0 0
      %652 = vmatprep.subr.bf16.mxu0 0
      %653 = vmatpush1.bf16.xpose.msra.mxu0 0
      %654 = vmatprep.subr.bf16.mxu0 0
      %655 = vmatpush1.bf16.xpose.msra.mxu0 0
      %656 = vmatprep.subr.bf16.mxu0 0
      %657 = vmatpush1.bf16.xpose.msra.mxu0 0
      %658 = vmatprep.subr.bf16.mxu0 0
      %659 = vmatpush1.bf16.xpose.msra.mxu0 0
      %660 = vmatprep.subr.bf16.mxu0 0
      %661 = vmatpush1.bf16.xpose.msra.mxu0 0
      %662 = vmatprep.subr.bf16.mxu0 0
      %663 = vmatpush1.bf16.xpose.msra.mxu0 %v646
      %664 = vmatprep.subr.bf16.mxu0 0
      %665 = vmatpush2.bf16.xpose.msra.mxu0 0
      %666 = vmatprep.subr.bf16.mxu0 0
      %667 = vmatpush2.bf16.xpose.msra.mxu0 0
      %668 = vmatprep.subr.bf16.mxu0 0
      %669 = vmatpush2.bf16.xpose.msra.mxu0 0
      %670 = vmatprep.subr.bf16.mxu0 0
      %671 = vmatpush2.bf16.xpose.msra.mxu0 0
      %672 = vmatprep.subr.bf16.mxu0 0
      %673 = vmatpush2.bf16.xpose.msra.mxu0 0
      %674 = vmatprep.subr.bf16.mxu0 0
      %675 = vmatpush2.bf16.xpose.msra.mxu0 0
      %676 = vmatprep.subr.bf16.mxu0 0
      %677 = vmatpush2.bf16.xpose.msra.mxu0 0
      %678 = vmatprep.subr.bf16.mxu0 0
      %679 = vmatpush2.bf16.xpose.msra.mxu0 0
      %680 = vmatprep.mubr.bf16.mxu0 0
      %681 = vmatmul.mubr.bf16.gmra.mxu0 %v643
      %v682 = vpop.f32.mrf.mxu0
      %v683 = vadd.f32 0.0, %v682
      %v684 = vpop.f32.mrf.mxu0
      %v685 = vpop.f32.mrf.mxu0
      %v686 = vpop.f32.mrf.mxu0
      %687 = vdwg.mxu0
      %v688 = vsel %vm258, %v683, -inf
      %689 = vmax.xlane.f32.xlu0 %v688
      %v690 = vpop.xlane.xlu0 %689
      %v691 = vsub.f32 %v683, %v690
      %v692 = vmul.f32 %v691, 1.442695
      %v693 = vpow.pop %v692
      %v694 = vsel %vm258, %v693, 0.0
      %695 = vadd.xlane.f32.xlu0 %v694
      %v696 = vpop.xlane.xlu0 %695
      %v697 = vpack.c.bf16 %v693, %v693
      %v699 = vunpack.c.l.b16 %v631
      %v700 = vpack.c.b16 %v699, %v699
      %701 = vrot.lane.b32.xlu0 %v700, 104
      %v702 = vpop.permute.xlu0 %701
      %v704 = vsel %vm258, %v697, 0
      %v707 = vsel %vm318, %v702, 0
      %709 = vmatprep.subr.bf16.mxu0 0
      %710 = vmatpush1.bf16.msra.mxu0 0
      %711 = vmatprep.subr.bf16.mxu0 0
      %712 = vmatpush1.bf16.msra.mxu0 0
      %713 = vmatprep.subr.bf16.mxu0 0
      %714 = vmatpush1.bf16.msra.mxu0 0
      %715 = vmatprep.subr.bf16.mxu0 0
      %716 = vmatpush1.bf16.msra.mxu0 0
      %717 = vmatprep.subr.bf16.mxu0 0
      %718 = vmatpush1.bf16.msra.mxu0 0
      %719 = vmatprep.subr.bf16.mxu0 0
      %720 = vmatpush1.bf16.msra.mxu0 0
      %721 = vmatprep.subr.bf16.mxu0 0
      %722 = vmatpush1.bf16.msra.mxu0 0
      %723 = vmatprep.subr.bf16.mxu0 0
      %724 = vmatpush1.bf16.msra.mxu0 %v707
      %725 = vmatprep.subr.bf16.mxu0 0
      %726 = vmatpush2.bf16.msra.mxu0 0
      %727 = vmatprep.subr.bf16.mxu0 0
      %728 = vmatpush2.bf16.msra.mxu0 0
      %729 = vmatprep.subr.bf16.mxu0 0
      %730 = vmatpush2.bf16.msra.mxu0 0
      %731 = vmatprep.subr.bf16.mxu0 0
      %732 = vmatpush2.bf16.msra.mxu0 0
      %733 = vmatprep.subr.bf16.mxu0 0
      %734 = vmatpush2.bf16.msra.mxu0 0
      %735 = vmatprep.subr.bf16.mxu0 0
      %736 = vmatpush2.bf16.msra.mxu0 0
      %737 = vmatprep.subr.bf16.mxu0 0
      %738 = vmatpush2.bf16.msra.mxu0 0
      %739 = vmatprep.subr.bf16.mxu0 0
      %740 = vmatpush2.bf16.msra.mxu0 0
      %741 = vmatprep.mubr.bf16.mxu0 0
      %742 = vmatmul.mubr.bf16.gmra.mxu0 %v704
      %v743 = vpop.f32.mrf.mxu0
      %v744 = vadd.f32 0.0, %v743
      %v745 = vpop.f32.mrf.mxu0
      %v746 = vpop.f32.mrf.mxu0
      %v747 = vpop.f32.mrf.mxu0
      %748 = vdwg.mxu0
      %v749 = vrcp.pop %v696
      %v750 = vmul.f32 %v744, %v749
      %v751 = vpack.c.bf16 %v750, %v750
      %v753 = vunpack.c.l.b16 %v751
      %v754 = vpack.c.b16 %v753, %v753
      %755 = vrot.lane.b32.xlu0 %v754, 24
      %v756 = vpop.permute.xlu0 %755
      %vm758 = vcmask 257216
      %759 = vst.msk [vmem:[#allocation2] sm:$0xf] %vm758, %v756
      %v760 = vld [vmem:[#allocation2] sm:$0xf]
      %v761 = vld [vmem:[%s3] sm:$0xf]
      %v762 = vld [vmem:[%s3 + $0x4] sm:$0xf]
      %v763 = vld [vmem:[%s3 + $0x8] sm:$0xf]
      %v764 = vld [vmem:[%s3 + $0xc] sm:$0xf]
      %v765 = vld [vmem:[%s4] sm:$0x1]
      %v767 = vlaneseq
      %v768 = vshrl.u32 %v767, 7
      %v769 = vsub.s32 0, %v768
      %v770 = vrot.slane %v765, %v769
      %v776 = vunpack.c.l.b16 %v761
      %v777 = vunpack.c.l.b16 %v762
      %v778 = vunpack.c.l.b16 %v763
      %v779 = vunpack.c.l.b16 %v764
      %v780 = vpack.c.b16 %v777, %v776
      %v781 = vpack.c.b16 %v779, %v778
      %vm784 = vcmask 261120
      %v786 = vsel %vm784, %v760, 0
      %788 = vmatprep.subr.bf16.mxu0 0
      %789 = vmatpush1.bf16.msra.mxu0 0
      %790 = vmatprep.subr.bf16.mxu0 0
      %791 = vmatpush1.bf16.msra.mxu0 0
      %792 = vmatprep.subr.bf16.mxu0 0
      %793 = vmatpush1.bf16.msra.mxu0 0
      %794 = vmatprep.subr.bf16.mxu0 0
      %795 = vmatpush1.bf16.msra.mxu0 0
      %796 = vmatprep.subr.bf16.mxu0 0
      %797 = vmatpush1.bf16.msra.mxu0 0
      %798 = vmatprep.subr.bf16.mxu0 0
      %799 = vmatpush1.bf16.msra.mxu0 0
      %800 = vmatprep.subr.bf16.mxu0 0
      %801 = vmatpush1.bf16.msra.mxu0 %v781
      %802 = vmatprep.subr.bf16.mxu0 0
      %803 = vmatpush1.bf16.msra.mxu0 %v780
      %804 = vmatprep.subr.bf16.mxu0 0
      %805 = vmatpush2.bf16.msra.mxu0 0
      %806 = vmatprep.subr.bf16.mxu0 0
      %807 = vmatpush2.bf16.msra.mxu0 0
      %808 = vmatprep.subr.bf16.mxu0 0
      %809 = vmatpush2.bf16.msra.mxu0 0
      %810 = vmatprep.subr.bf16.mxu0 0
      %811 = vmatpush2.bf16.msra.mxu0 0
      %812 = vmatprep.subr.bf16.mxu0 0
      %813 = vmatpush2.bf16.msra.mxu0 0
      %814 = vmatprep.subr.bf16.mxu0 0
      %815 = vmatpush2.bf16.msra.mxu0 0
      %816 = vmatprep.subr.bf16.mxu0 0
      %817 = vmatpush2.bf16.msra.mxu0 0
      %818 = vmatprep.subr.bf16.mxu0 0
      %819 = vmatpush2.bf16.msra.mxu0 0
      %820 = vmatprep.mubr.bf16.mxu0 0
      %821 = vmatmul.mubr.bf16.gmra.mxu0 %v786
      %v822 = vpop.f32.mrf.mxu0
      %v823 = vadd.f32 %v770, %v822
      %v824 = vpop.f32.mrf.mxu0
      %v825 = vpop.f32.mrf.mxu0
      %v826 = vpop.f32.mrf.mxu0
      %827 = vdwg.mxu0
      %v828 = vpack.c.bf16 %v823, %v823
      %vm829 = vcmask 257024
      %830 = vst.msk [vmem:[%s253] sm:$0xf] %vm829, %v828
      %p831 = scmp.lt.s32.totalorder %s16, 1
      %s832 = scalar_select %p831, %s16, 1
      %s833 = smul.addr %s832, 4
      %s834 = scalar_lea.vmem %s5, %s833
      // Predicated region
      $region41: #{base_cross_attention_forward.4} parent=39 // pred_check
        %p835 = pneg %p154
      $region42: #{base_cross_attention_forward.4} parent=39 // pred_check_branch
        %837 = sbr.rel (%p835) target = $region44
      $region43: #{base_cross_attention_forward.4} parent=39 // pred_region
        _
      $region44: #{base_cross_attention_forward.4} parent=39 // pred_fallthru
        _
    $region40: #{base_cross_attention_forward.4} parent=5 // pred_fallthru
      _
    %p838 = scmp.le.s32.totalorder 2, %s11
    // Predicated region
    $region45: #{base_cross_attention_forward.4} parent=5 // pred_check
      %p839 = pneg %p838
    $region46: #{base_cross_attention_forward.4} parent=5 // pred_check_branch
      %841 = sbr.rel (%p839) target = $region48
    $region47: #{base_cross_attention_forward.4} parent=5 // pred_region
      %s842 = ssub.s32 %s11, 2
      // Predicated region
      $region49: #{base_cross_attention_forward.4} parent=47 // pred_check
        %p843 = pneg %p160
      $region50: #{base_cross_attention_forward.4} parent=47 // pred_check_branch
        %845 = sbr.rel (%p843) target = $region52
      $region51: #{base_cross_attention_forward.4} parent=47 // pred_region
        %p846 = scmp.lt.s32.totalorder %s17, 1
        %s847 = scalar_select %p846, %s17, 1
        %s848 = smul.addr %s847, 4
        %s849 = scalar_lea.vmem %s5, %s848
      $region52: #{base_cross_attention_forward.4} parent=47 // pred_fallthru
        _
    $region48: #{base_cross_attention_forward.4} parent=5 // pred_fallthru
      _
  $region6: #{base_cross_attention_forward.4} parent=0 // loop_footer
    %s15 = sadd.s32 1, %s11
  $region7: #{base_cross_attention_forward.4} parent=0 // loop_footer_branch
    %10 = sbr.rel target = $region3
  $region8: #{base_cross_attention_forward.4} parent=0 // loop_exit
    _

</llo_original>
